<compile_context>
chip_gen: v7x
topology: tpu7x:2x2x1
jax: 0.10.0
libtpu: 0.0.40
codegen_flags: <defaults>
</compile_context>

<pallas_src>
import functools

import jax
import jax.numpy as jnp
from jax.experimental import pallas as pl
from jax.experimental.pallas import tpu as pltpu

D_IN = 512
D_HID = 512
D_OUT = 300
D_OUT_PAD = 384  # 300 rounded up to a multiple of 128 -> unmasked vector stores


def _round_up(x, m):
    return (x + m - 1) // m * m


def _openl3_kernel(x_ref, w1_ref, b1_ref, w2_ref, b2_ref, o_ref, acc_ref, *,
                   inv_t, t_tile, t_total, mask_time):
    # x_ref : (b_tile, t_tile, 512)   streamed over the time grid axis
    # w1_ref: (512, 512)  b1_ref: (1, 512)   -- resident across the grid
    # w2_ref: (512, 384)  b2_ref: (1, 384)   -- resident across the grid
    # o_ref : (b_tile, 384)
    # acc_ref: (b_tile, 512) f32 running sum over time
    t = pl.program_id(1)

    @pl.when(t == 0)
    def _():
        acc_ref[...] = jnp.zeros_like(acc_ref)

    xs = x_ref[...]
    if mask_time:
        # Ragged final time tile: Pallas does NOT guarantee zeros for OOB block
        # reads, so mask garbage time rows before they enter the running sum.
        row = jax.lax.broadcasted_iota(jnp.int32, xs.shape, 1)
        valid = (t * t_tile + row) < t_total
        xs = jnp.where(valid, xs, jnp.zeros((), xs.dtype))

    # Streamed partial sum over time, accumulated in f32 without materializing
    # an f32 copy of the whole slab.
    acc_ref[...] += jnp.sum(xs, axis=1, dtype=jnp.float32)

    @pl.when(t == pl.num_programs(1) - 1)
    def _():
        x_mean = acc_ref[...] * inv_t                                   # (b_tile, 512) f32

        # fc: Dropout(identity) -> Linear(512, 512) -> ReLU -> Dropout(identity)
        # Weights stay in their native dtype on the MXU; f32 accumulation.
        h = jnp.dot(x_mean.astype(w1_ref.dtype), w1_ref[...],
                    preferred_element_type=jnp.float32)
        h = jnp.maximum(h + b1_ref[...].astype(jnp.float32), 0.0)

        # fc2: Linear(512, 300), zero-padded to 384 lanes (sliced in the wrapper).
        y = jnp.dot(h.astype(w2_ref.dtype), w2_ref[...],
                    preferred_element_type=jnp.float32)
        y = y + b2_ref[...].astype(jnp.float32)

        o_ref[...] = y.astype(o_ref.dtype)


def openl3_embeddings(x, w1, b1, w2, b2, *, max_time_tile=None):
    """x: (B, T, 512). w1: (512,512) [in,out], b1: (512,), w2: (512,300), b2: (300,).

    Returns (B, 1, 300), matching OpenL3Embeddings.forward in eval mode.
    `max_time_tile` is a test-only cap on the time tile size.
    """
    B, T, D = x.shape
    assert D == D_IN
    x_itemsize = jnp.dtype(x.dtype).itemsize
    w_itemsize = jnp.dtype(w1.dtype).itemsize

    # ---- batch tiling ---------------------------------------------------------
    # >= 2 batch blocks whenever B > 8 so the "parallel" axis can shard across
    # both TensorCores on v7x (harmless on single-TC v5e/v6e).  For B <= 8 use
    # the full batch as one block (full-dim blocks are exempt from the 8-align
    # rule), avoiding any batch padding / copy of x.
    if B <= 8:
        b_tile = B
    else:
        b_tile = min(128, _round_up(pl.cdiv(B, 2), 8))
    nb = pl.cdiv(B, b_tile)

    # ---- time tiling ----------------------------------------------------------
    # ~8 MiB per x buffer: large enough to sit near the HBM roofline, small
    # enough that a 3-deep pipeline + resident weights fit every generation.
    tile_budget = 8 * 1024 * 1024
    max_t_tile = max(8, (tile_budget // (b_tile * D_IN * x_itemsize)) // 8 * 8)
    if max_time_tile is not None:
        max_t_tile = min(max_t_tile, max(8, max_time_tile // 8 * 8))
    t_tile = T if T <= max_t_tile else max_t_tile   # full-dim time block if it fits
    nt = pl.cdiv(T, t_tile)
    mask_time = (T % t_tile) != 0                   # ragged last tile -> in-kernel mask

    # Parameter prep: biases as 2-D rows, output dim zero-padded 300 -> 384.
    b1_2d = b1.reshape(1, D_HID)
    w2_p = jnp.pad(w2, ((0, 0), (0, D_OUT_PAD - D_OUT)))
    b2_p = jnp.pad(b2.reshape(1, D_OUT), ((0, 0), (0, D_OUT_PAD - D_OUT)))

    # VMEM budget: worst case over {3-deep x + single-buffered weights} and the
    # no-pipeline_mode fallback {2-deep x + double-buffered weights}.
    vmem_needed = (
        3 * b_tile * t_tile * D_IN * x_itemsize
        + 2 * (D_IN * D_HID + D_HID * D_OUT_PAD + D_HID + D_OUT_PAD) * w_itemsize
        + b_tile * D_HID * 4
        + 2 * b_tile * D_OUT_PAD * x_itemsize
    )
    try:
        phys_vmem = pltpu.get_tpu_info().vmem_capacity_bytes
    except Exception:
        phys_vmem = 64 * 1024 * 1024    # v7x per-TC size = smallest of all generations
    vmem_limit = min(max(int(vmem_needed * 1.3), 16 * 1024 * 1024),
                     int(phys_vmem * 0.7))

    cost = pl.CostEstimate(
        flops=2 * B * (D_IN * D_HID + D_HID * D_OUT),
        transcendentals=0,
        bytes_accessed=(
            B * T * D_IN * x_itemsize
            + (D_IN * D_HID + D_HID * D_OUT + D_HID + D_OUT) * w_itemsize
            + B * D_OUT * x_itemsize
        ),
    )

    kernel = functools.partial(
        _openl3_kernel, inv_t=1.0 / float(T), t_tile=t_tile, t_total=T,
        mask_time=mask_time)

    def run(use_pipeline_mode):
        def spec(shape, index_map, bufs):
            if use_pipeline_mode:
                return pl.BlockSpec(shape, index_map, pipeline_mode=pl.Buffered(bufs))
            return pl.BlockSpec(shape, index_map)

        return pl.pallas_call(
            kernel,
            out_shape=jax.ShapeDtypeStruct((B, D_OUT_PAD), x.dtype),
            grid_spec=pltpu.PrefetchScalarGridSpec(
                num_scalar_prefetch=0,
                grid=(nb, nt),
                in_specs=[
                    # streamed x: 3-deep so DMA i+2 is in flight while i+1 streams
                    spec((b_tile, t_tile, D_IN), lambda b, t: (b, t, 0), 3),
                    # weights / biases: constant index_map -> resident, 1 buffer
                    spec((D_IN, D_HID), lambda b, t: (0, 0), 1),
                    spec((1, D_HID), lambda b, t: (0, 0), 1),
                    spec((D_HID, D_OUT_PAD), lambda b, t: (0, 0), 1),
                    spec((1, D_OUT_PAD), lambda b, t: (0, 0), 1),
                ],
                out_specs=pl.BlockSpec((b_tile, D_OUT_PAD), lambda b, t: (b, 0)),
                scratch_shapes=[pltpu.VMEM((b_tile, D_HID), jnp.float32)],
            ),
            compiler_params=pltpu.CompilerParams(
                dimension_semantics=("parallel", "arbitrary"),
                vmem_limit_bytes=vmem_limit,
            ),
            cost_estimate=cost,
        )(x, w1, b1_2d, w2_p, b2_p)

    try:
        out = run(True)
    except Exception:
        # Runtimes without BlockSpec.pipeline_mode support: fall back to the
        # default double-buffered pipeline (identical semantics).
        out = run(False)

    # unsqueeze(1) and drop the lane padding -> (B, 1, 300).
    return out[:, None, :D_OUT]


def _reference(x, w1, b1, w2, b2):
    x2 = jnp.mean(x.astype(jnp.float32), axis=1)
    h = jnp.maximum(x2 @ w1.astype(jnp.float32) + b1, 0.0)
    y = h @ w2.astype(jnp.float32) + b2
    return y[:, None, :].astype(x.dtype)


if __name__ == "__main__":
    key = jax.random.PRNGKey(0)
    k_x, k_w1, k_b1, k_w2, k_b2, k_x2 = jax.random.split(key, 6)

    # Deterministic synthetic parameters (Linear weights stored pre-transposed as (in, out)).
    w1 = jax.random.normal(k_w1, (D_IN, D_HID), dtype=jnp.float32) * 0.02
    b1 = jax.random.normal(k_b1, (D_HID,), dtype=jnp.float32) * 0.01
    w2 = jax.random.normal(k_w2, (D_HID, D_OUT), dtype=jnp.float32) * 0.02
    b2 = jax.random.normal(k_b2, (D_OUT,), dtype=jnp.float32) * 0.01

    # Test 1: small, aligned shapes (batch=2, time_steps=8, Mel_bands=512).
    B, T = 2, 8
    x = jax.random.normal(k_x, (B, T, D_IN), dtype=jnp.float32)
    out = jax.block_until_ready(openl3_embeddings(x, w1, b1, w2, b2))
    ref = _reference(x, w1, b1, w2, b2)
    assert out.shape == (B, 1, D_OUT), out.shape
    assert jnp.allclose(out, ref, atol=1e-4, rtol=1e-4), "mismatch vs pure-JAX reference"

    # Test 2: ragged batch (10 -> b_tile 8) and ragged time (13 with t_tile 8)
    # to exercise the in-kernel time mask and masked output stores.
    B2, T2 = 10, 13
    x2 = jax.random.normal(k_x2, (B2, T2, D_IN), dtype=jnp.float32)
    out2 = jax.block_until_ready(
        openl3_embeddings(x2, w1, b1, w2, b2, max_time_tile=8))
    ref2 = _reference(x2, w1, b1, w2, b2)
    assert out2.shape == (B2, 1, D_OUT), out2.shape
    assert jnp.allclose(out2, ref2, atol=1e-4, rtol=1e-4), "ragged-case mismatch"

    print("KERNEL_OK")
</pallas_src>

<mosaic_0001>
module attributes {stable_mosaic.version = 11 : i64} {
  func.func @_openl3_kernel(%arg0: i32, %arg1: i32, %arg2: memref<2x8x512xf32, #tpu.memory_space<vmem>>, %arg3: memref<512x512xf32, #tpu.memory_space<vmem>>, %arg4: memref<1x512xf32, #tpu.memory_space<vmem>>, %arg5: memref<512x384xf32, #tpu.memory_space<vmem>>, %arg6: memref<1x384xf32, #tpu.memory_space<vmem>>, %arg7: memref<2x384xf32, #tpu.memory_space<vmem>>, %arg8: memref<2x512xf32, #tpu.memory_space<vmem>>) attributes {dimension_semantics = [#tpu.dimension_semantics<parallel>, #tpu.dimension_semantics<arbitrary>], iteration_bounds = array<i64: 1, 1>, scalar_prefetch = 0 : i64, scratch_operands = 1 : i64, tpu.core_type = #tpu.core_type<tc>, window_params = [{transform_indices = @transform_0, window_bounds = array<i64: 2, 8, 512>}, {pipeline_mode = #tpu.pipeline_mode<synchronous>, transform_indices = @transform_1, window_bounds = array<i64: 512, 512>}, {pipeline_mode = #tpu.pipeline_mode<synchronous>, transform_indices = @transform_2, window_bounds = array<i64: 1, 512>}, {pipeline_mode = #tpu.pipeline_mode<synchronous>, transform_indices = @transform_3, window_bounds = array<i64: 512, 384>}, {pipeline_mode = #tpu.pipeline_mode<synchronous>, transform_indices = @transform_4, window_bounds = array<i64: 1, 384>}, {transform_indices = @transform_5, window_bounds = array<i64: 2, 384>}]} {
    %c0_i32 = arith.constant 0 : i32
    %0 = arith.cmpi eq, %arg1, %c0_i32 : i32
    %1 = arith.extui %0 : i1 to i32
    %c0_i32_0 = arith.constant 0 : i32
    %2 = arith.cmpi ne, %1, %c0_i32_0 : i32
    scf.if %2 {
      %cst_9 = arith.constant 0.000000e+00 : f32
      %11 = vector.broadcast %cst_9 : f32 to vector<2x512xf32>
      %c0_10 = arith.constant 0 : index
      %c0_11 = arith.constant 0 : index
      %12 = vector.load %arg8[%c0_10, %c0_11] : memref<2x512xf32, #tpu.memory_space<vmem>>, vector<2x512xf32>
      tpu.vector_store %arg8[%c0_10, %c0_11], %11 {strides = array<i32>} : memref<2x512xf32, #tpu.memory_space<vmem>>, vector<2x512xf32>,
    } else {
    }
    %c0 = arith.constant 0 : index
    %c0_1 = arith.constant 0 : index
    %c0_2 = arith.constant 0 : index
    %3 = vector.load %arg2[%c0, %c0_1, %c0_2] : memref<2x8x512xf32, #tpu.memory_space<vmem>>, vector<2x8x512xf32>
    %c0_3 = arith.constant 0 : index
    %c0_4 = arith.constant 0 : index
    %4 = vector.load %arg8[%c0_3, %c0_4] : memref<2x512xf32, #tpu.memory_space<vmem>>, vector<2x512xf32>
    %cst = arith.constant dense<0.000000e+00> : vector<2x512xf32>
    %5 = vector.multi_reduction <add>, %3, %cst [1] : vector<2x8x512xf32> to vector<2x512xf32>
    %6 = arith.addf %4, %5 : vector<2x512xf32>
    %c0_5 = arith.constant 0 : index
    %c0_6 = arith.constant 0 : index
    %7 = vector.load %arg8[%c0_5, %c0_6] : memref<2x512xf32, #tpu.memory_space<vmem>>, vector<2x512xf32>
    tpu.vector_store %arg8[%c0_5, %c0_6], %6 {strides = array<i32>} : memref<2x512xf32, #tpu.memory_space<vmem>>, vector<2x512xf32>,
    %c0_i32_7 = arith.constant 0 : i32
    %8 = arith.cmpi eq, %arg1, %c0_i32_7 : i32
    %9 = arith.extui %8 : i1 to i32
    %c0_i32_8 = arith.constant 0 : i32
    %10 = arith.cmpi ne, %9, %c0_i32_8 : i32
    scf.if %10 {
      %c0_9 = arith.constant 0 : index
      %c0_10 = arith.constant 0 : index
      %11 = vector.load %arg8[%c0_9, %c0_10] : memref<2x512xf32, #tpu.memory_space<vmem>>, vector<2x512xf32>
      %cst_11 = arith.constant 1.250000e-01 : f32
      %12 = vector.broadcast %cst_11 : f32 to vector<2x512xf32>
      %13 = arith.mulf %11, %12 : vector<2x512xf32>
      %c0_12 = arith.constant 0 : index
      %c0_13 = arith.constant 0 : index
      %14 = vector.load %arg3[%c0_12, %c0_13] : memref<512x512xf32, #tpu.memory_space<vmem>>, vector<512x512xf32>
      %cst_14 = arith.constant dense<0.000000e+00> : vector<2x512xf32>
      %15 = tpu.matmul %13, %14, %cst_14 {dimension_numbers = #tpu.dot_dimension_numbers<[1], [0], [0], [1], [0, 0, 1, 1], [], []>} : vector<2x512xf32>, vector<512x512xf32>, vector<2x512xf32> -> vector<2x512xf32>
      %c0_15 = arith.constant 0 : index
      %c0_16 = arith.constant 0 : index
      %16 = vector.load %arg4[%c0_15, %c0_16] : memref<1x512xf32, #tpu.memory_space<vmem>>, vector<1x512xf32>
      %17 = vector.broadcast %16 : vector<1x512xf32> to vector<2x512xf32>
      %18 = arith.addf %15, %17 : vector<2x512xf32>
      %cst_17 = arith.constant 0.000000e+00 : f32
      %19 = vector.broadcast %cst_17 : f32 to vector<2x512xf32>
      %20 = arith.maximumf %18, %19 : vector<2x512xf32>
      %c0_18 = arith.constant 0 : index
      %c0_19 = arith.constant 0 : index
      %21 = vector.load %arg5[%c0_18, %c0_19] : memref<512x384xf32, #tpu.memory_space<vmem>>, vector<512x384xf32>
      %cst_20 = arith.constant dense<0.000000e+00> : vector<2x384xf32>
      %22 = tpu.matmul %20, %21, %cst_20 {dimension_numbers = #tpu.dot_dimension_numbers<[1], [0], [0], [1], [0, 0, 1, 1], [], []>} : vector<2x512xf32>, vector<512x384xf32>, vector<2x384xf32> -> vector<2x384xf32>
      %c0_21 = arith.constant 0 : index
      %c0_22 = arith.constant 0 : index
      %23 = vector.load %arg6[%c0_21, %c0_22] : memref<1x384xf32, #tpu.memory_space<vmem>>, vector<1x384xf32>
      %24 = vector.broadcast %23 : vector<1x384xf32> to vector<2x384xf32>
      %25 = arith.addf %22, %24 : vector<2x384xf32>
      %c0_23 = arith.constant 0 : index
      %c0_24 = arith.constant 0 : index
      %26 = vector.load %arg7[%c0_23, %c0_24] : memref<2x384xf32, #tpu.memory_space<vmem>>, vector<2x384xf32>
      tpu.vector_store %arg7[%c0_23, %c0_24], %25 {strides = array<i32>} : memref<2x384xf32, #tpu.memory_space<vmem>>, vector<2x384xf32>,
    } else {
    }
    return
  }
  func.func @transform_0(%arg0: i32, %arg1: i32) -> (i32, i32, i32) {
    %c0_i32 = arith.constant 0 : i32
    %c0_i32_0 = arith.constant 0 : i32
    return %arg0, %arg1, %c0_i32 : i32, i32, i32
  }
  func.func @transform_1(%arg0: i32, %arg1: i32) -> (i32, i32) {
    %c0_i32 = arith.constant 0 : i32
    %c0_i32_0 = arith.constant 0 : i32
    %c0_i32_1 = arith.constant 0 : i32
    return %c0_i32, %c0_i32_0 : i32, i32
  }
  func.func @transform_2(%arg0: i32, %arg1: i32) -> (i32, i32) {
    %c0_i32 = arith.constant 0 : i32
    %c0_i32_0 = arith.constant 0 : i32
    %c0_i32_1 = arith.constant 0 : i32
    return %c0_i32, %c0_i32_0 : i32, i32
  }
  func.func @transform_3(%arg0: i32, %arg1: i32) -> (i32, i32) {
    %c0_i32 = arith.constant 0 : i32
    %c0_i32_0 = arith.constant 0 : i32
    %c0_i32_1 = arith.constant 0 : i32
    return %c0_i32, %c0_i32_0 : i32, i32
  }
  func.func @transform_4(%arg0: i32, %arg1: i32) -> (i32, i32) {
    %c0_i32 = arith.constant 0 : i32
    %c0_i32_0 = arith.constant 0 : i32
    %c0_i32_1 = arith.constant 0 : i32
    return %c0_i32, %c0_i32_0 : i32, i32
  }
  func.func @transform_5(%arg0: i32, %arg1: i32) -> (i32, i32) {
    %c0_i32 = arith.constant 0 : i32
    %c0_i32_0 = arith.constant 0 : i32
    return %arg0, %c0_i32 : i32, i32
  }
}

</mosaic_0001>

<llo_original>
// kernel: tpu_custom_call.1
$region0: #{tpu_custom_call.1}
  #allocation0 [shape = 'u32[]', space=smem, size = 0x4, offset = 0x4, fixed_abs, tag = 'smem constant byte address 0x4 - core index']
  #allocation1 [shape = 'u32[144,128]{1,0:T(1,128)}', space=vmem, size = 0x12000, scoped, tag = 'internal scratch']
  #allocation2 [shape = 'f32[2,512]{1,0:T(2,128)}', space=vmem, size = 0x1000, scoped, tag = 'scratch operand']
  %s0 = inlined_call_operand.hbm [shape: f32[2,8,512], index: 0, kind: input, shape index: {}]
  %s1 = inlined_call_operand.hbm [shape: f32[512,512], index: 1, kind: input, shape index: {}]
  %s2 = inlined_call_operand.vmem [shape: f32[1,512], index: 2, kind: input, shape index: {}]
  %s3 = inlined_call_operand.hbm [shape: f32[512,384], index: 3, kind: input, shape index: {}]
  %s4 = inlined_call_operand.vmem [shape: f32[1,384], index: 4, kind: input, shape index: {}]
  %s5 = inlined_call_operand.hbm [shape: f32[2,384], index: 5, kind: output, shape index: {}]
  %s6 = sld [smem:[#allocation0]]
  $region50: #{tpu_custom_call.1} parent=0
    _
  %s8 = ssub.s32 1, %s6
  %s9 = scalar_select 0, %s8, %s6
  $region1: #{tpu_custom_call.1} parent=0
    #allocation3 [shape = 'u8[32768]{0}', space=vmem, size = 0x8000, scoped, tag = 'input window, operand 0, single buffered']
    #allocation4 [shape = 's32[1]{0}', space=sflag, size = 0x4, scoped, tag = 'scoped memory for tpu_custom_call.1']
    #allocation5 [shape = 's32[1]{0}', space=sflag, size = 0x4, scoped, tag = 'scoped memory for tpu_custom_call.1']
    #allocation6 [shape = 'u8[1048576]{0}', space=vmem, size = 0x100000, scoped, tag = 'input window, operand 1, single buffered']
    #allocation7 [shape = 's32[1]{0}', space=sflag, size = 0x4, scoped, tag = 'scoped memory for tpu_custom_call.1']
    #allocation8 [shape = 'u8[786432]{0}', space=vmem, size = 0xc0000, scoped, tag = 'input window, operand 3, single buffered']
    #allocation9 [shape = 'u8[3072]{0}', space=vmem, size = 0xc00, scoped, tag = 'output window, operand 0, single buffered']
    %10 = vsyncpa [#allocation4], 0
    %11 = vsyncpa [#allocation7], 0
    %12 = vsyncpa [#allocation5], 0
    // Predicated region
    $region2: #{tpu_custom_call.1} parent=1 // pred_check
      _
    $region3: #{tpu_custom_call.1} parent=1 // pred_check_branch
      %14 = sbr.rel (0) target = $region5
    $region4: #{tpu_custom_call.1} parent=1 // pred_region
      %s16 = ssub.s32 1024, 1024
      %17 = vsyncadd [#allocation4], %s16
      %s18 = sshll.u32 [#allocation3], 4
      %s19 = int_to_ptr.vmem [resolvable:$true] %s18
      %24 = dma.hbm_to_vmem [thread:$0]  %s0, 1024, %s19, [#allocation4], 512, 512, 32
    $region5: #{tpu_custom_call.1} parent=1 // pred_fallthru
      _
    // Predicated region
    $region6: #{tpu_custom_call.1} parent=1 // pred_check
      _
    $region7: #{tpu_custom_call.1} parent=1 // pred_check_branch
      %26 = sbr.rel (0) target = $region9
    $region8: #{tpu_custom_call.1} parent=1 // pred_region
      %s28 = ssub.s32 32768, 32768
      %29 = vsyncadd [#allocation7], %s28
      %s30 = sshll.u32 [#allocation6], 4
      %s31 = int_to_ptr.vmem [resolvable:$true] %s30
      %36 = dma.hbm_to_vmem [thread:$0]  %s1, 32768, %s31, [#allocation7], 512, 512, 32
    $region9: #{tpu_custom_call.1} parent=1 // pred_fallthru
      _
    // Predicated region
    $region10: #{tpu_custom_call.1} parent=1 // pred_check
      _
    $region11: #{tpu_custom_call.1} parent=1 // pred_check_branch
      %38 = sbr.rel (0) target = $region13
    $region12: #{tpu_custom_call.1} parent=1 // pred_region
      _
    $region13: #{tpu_custom_call.1} parent=1 // pred_fallthru
      _
    // Predicated region
    $region14: #{tpu_custom_call.1} parent=1 // pred_check
      _
    $region15: #{tpu_custom_call.1} parent=1 // pred_check_branch
      %40 = sbr.rel (0) target = $region17
    $region16: #{tpu_custom_call.1} parent=1 // pred_region
      %s42 = ssub.s32 24576, 24576
      %43 = vsyncadd [#allocation7], %s42
      %s44 = sshll.u32 [#allocation8], 4
      %s45 = int_to_ptr.vmem [resolvable:$true] %s44
      %50 = dma.hbm_to_vmem [thread:$0]  %s3, 24576, %s45, [#allocation7], 384, 384, 24
    $region17: #{tpu_custom_call.1} parent=1 // pred_fallthru
      _
    // Predicated region
    $region18: #{tpu_custom_call.1} parent=1 // pred_check
      _
    $region19: #{tpu_custom_call.1} parent=1 // pred_check_branch
      %52 = sbr.rel (0) target = $region21
    $region20: #{tpu_custom_call.1} parent=1 // pred_region
      _
    $region21: #{tpu_custom_call.1} parent=1 // pred_fallthru
      _
    // Predicated region
    $region22: #{tpu_custom_call.1} parent=1 // pred_check
      _
    $region23: #{tpu_custom_call.1} parent=1 // pred_check_branch
      %54 = sbr.rel (0) target = $region25
    $region24: #{tpu_custom_call.1} parent=1 // pred_region
      %55 = dma.done [#allocation4], 1024
    $region25: #{tpu_custom_call.1} parent=1 // pred_fallthru
      _
    // Predicated region
    $region26: #{tpu_custom_call.1} parent=1 // pred_check
      _
    $region27: #{tpu_custom_call.1} parent=1 // pred_check_branch
      %57 = sbr.rel (0) target = $region29
    $region28: #{tpu_custom_call.1} parent=1 // pred_region
      %58 = dma.done [#allocation7], 32768
    $region29: #{tpu_custom_call.1} parent=1 // pred_fallthru
      _
    // Predicated region
    $region30: #{tpu_custom_call.1} parent=1 // pred_check
      _
    $region31: #{tpu_custom_call.1} parent=1 // pred_check_branch
      %60 = sbr.rel (0) target = $region33
    $region32: #{tpu_custom_call.1} parent=1 // pred_region
      %61 = dma.done [#allocation7], 24576
    $region33: #{tpu_custom_call.1} parent=1 // pred_fallthru
      _
    %p62 = scmp.eq.s32.totalorder 0, 0
    // Predicated region
    $region34: #{tpu_custom_call.1} parent=1 // pred_check
      %p63 = pneg %p62
    $region35: #{tpu_custom_call.1} parent=1 // pred_check_branch
      %65 = sbr.rel (%p63) target = $region37
    $region36: #{tpu_custom_call.1} parent=1 // pred_region
      %66 = vst [vmem:[#allocation2] sm:$0xff] 0.0
    $region37: #{tpu_custom_call.1} parent=1 // pred_fallthru
      _
    %v67 = vld [vmem:[#allocation3] sm:$0xff]
    %v68 = vld [vmem:[#allocation3 + $0x8] sm:$0xff]
    %v69 = vld [vmem:[#allocation3 + $0x10] sm:$0xff]
    %v70 = vld [vmem:[#allocation3 + $0x18] sm:$0xff]
    %v71 = vld [vmem:[#allocation3 + $0x20] sm:$0xff]
    %v72 = vld [vmem:[#allocation3 + $0x28] sm:$0xff]
    %v73 = vld [vmem:[#allocation3 + $0x30] sm:$0xff]
    %v74 = vld [vmem:[#allocation3 + $0x38] sm:$0xff]
    %v75 = vld [vmem:[#allocation2] sm:$0xff]
    %v76 = vrot.slane %v67, 4
    %v77 = vadd.f32 %v67, %v76
    %v78 = vrot.slane %v77, 2
    %v79 = vadd.f32 %v77, %v78
    %v80 = vrot.slane %v79, 1
    %v81 = vadd.f32 %v79, %v80
    %v82 = vrot.slane %v68, 4
    %v83 = vadd.f32 %v68, %v82
    %v84 = vrot.slane %v83, 2
    %v85 = vadd.f32 %v83, %v84
    %v86 = vrot.slane %v85, 1
    %v87 = vadd.f32 %v85, %v86
    %v88 = vrot.slane %v69, 4
    %v89 = vadd.f32 %v69, %v88
    %v90 = vrot.slane %v89, 2
    %v91 = vadd.f32 %v89, %v90
    %v92 = vrot.slane %v91, 1
    %v93 = vadd.f32 %v91, %v92
    %v94 = vrot.slane %v70, 4
    %v95 = vadd.f32 %v70, %v94
    %v96 = vrot.slane %v95, 2
    %v97 = vadd.f32 %v95, %v96
    %v98 = vrot.slane %v97, 1
    %v99 = vadd.f32 %v97, %v98
    %v100 = vrot.slane %v71, 4
    %v101 = vadd.f32 %v71, %v100
    %v102 = vrot.slane %v101, 2
    %v103 = vadd.f32 %v101, %v102
    %v104 = vrot.slane %v103, 1
    %v105 = vadd.f32 %v103, %v104
    %v106 = vrot.slane %v72, 4
    %v107 = vadd.f32 %v72, %v106
    %v108 = vrot.slane %v107, 2
    %v109 = vadd.f32 %v107, %v108
    %v110 = vrot.slane %v109, 1
    %v111 = vadd.f32 %v109, %v110
    %v112 = vrot.slane %v73, 4
    %v113 = vadd.f32 %v73, %v112
    %v114 = vrot.slane %v113, 2
    %v115 = vadd.f32 %v113, %v114
    %v116 = vrot.slane %v115, 1
    %v117 = vadd.f32 %v115, %v116
    %v118 = vrot.slane %v74, 4
    %v119 = vadd.f32 %v74, %v118
    %v120 = vrot.slane %v119, 2
    %v121 = vadd.f32 %v119, %v120
    %v122 = vrot.slane %v121, 1
    %v123 = vadd.f32 %v121, %v122
    %v132 = vcombine.low %v81, %v87
    %v133 = vcombine.low %v93, %v99
    %v135 = vunpack.c.l.s4 1983009808
    %v136 = vunpack.c.0.s8 %v135
    %v137 = vlaneseq
    %v138 = vshrl.u32 %v137, 7
    %v139 = vsub.s32 %v136, %v138
    %v140 = vrot.slane %v132, %v139
    %v142 = vunpack.c.l.s4 1983009808
    %v143 = vunpack.c.0.s8 %v142
    %v144 = vlaneseq
    %v145 = vshrl.u32 %v144, 7
    %v146 = vsub.s32 %v143, %v145
    %v147 = vrot.slane %v133, %v146
    %v148 = vcombine.low %v140, %v147
    %v149 = vcombine.low %v105, %v111
    %v150 = vcombine.low %v117, %v123
    %v152 = vunpack.c.l.s4 1983009808
    %v153 = vunpack.c.0.s8 %v152
    %v154 = vlaneseq
    %v155 = vshrl.u32 %v154, 7
    %v156 = vsub.s32 %v153, %v155
    %v157 = vrot.slane %v149, %v156
    %v159 = vunpack.c.l.s4 1983009808
    %v160 = vunpack.c.0.s8 %v159
    %v161 = vlaneseq
    %v162 = vshrl.u32 %v161, 7
    %v163 = vsub.s32 %v160, %v162
    %v164 = vrot.slane %v150, %v163
    %v165 = vcombine.low %v157, %v164
    %vm166 = vcmask 1044484
    %v167 = vsel %vm166, %v148, %v148
    %vm168 = vcmask 1046534
    %v169 = vsel %vm168, %v148, %v167
    %v170 = vrot.slane %v165, 7
    %vm171 = vcmask 1041409
    %v172 = vsel %vm171, %v170, %v169
    %vm173 = vcmask 1043459
    %v174 = vsel %vm173, %v170, %v172
    %vm175 = vcmask 1045509
    %v176 = vsel %vm175, %v170, %v174
    %vm177 = vcmask 1047559
    %v178 = vsel %vm177, %v170, %v176
    %v180 = vadd.f32 %v75, %v178
    %181 = vst [vmem:[#allocation2] sm:$0xff] %v180
    // Predicated region
    $region38: #{tpu_custom_call.1} parent=1 // pred_check
      %p182 = pneg %p62
    $region39: #{tpu_custom_call.1} parent=1 // pred_check_branch
      %184 = sbr.rel (%p182) target = $region41
    $region40: #{tpu_custom_call.1} parent=1 // pred_region
      %v185 = vld [vmem:[#allocation2] sm:$0xff]
      %v186 = vmul.f32 %v185, 0.125
      %v187 = vld [vmem:[#allocation6] sm:$0xff]
      %v188 = vld [vmem:[#allocation6 + $0x8] sm:$0xff]
      %v189 = vld [vmem:[#allocation6 + $0x10] sm:$0xff]
      %v190 = vld [vmem:[#allocation6 + $0x18] sm:$0xff]
      %v191 = vld [vmem:[#allocation6 + $0x20] sm:$0xff]
      %v192 = vld [vmem:[#allocation6 + $0x28] sm:$0xff]
      %v193 = vld [vmem:[#allocation6 + $0x30] sm:$0xff]
      %v194 = vld [vmem:[#allocation6 + $0x38] sm:$0xff]
      %v195 = vld [vmem:[#allocation6 + $0x40] sm:$0xff]
      %v196 = vld [vmem:[#allocation6 + $0x48] sm:$0xff]
      %v197 = vld [vmem:[#allocation6 + $0x50] sm:$0xff]
      %v198 = vld [vmem:[#allocation6 + $0x58] sm:$0xff]
      %v199 = vld [vmem:[#allocation6 + $0x60] sm:$0xff]
      %v200 = vld [vmem:[#allocation6 + $0x68] sm:$0xff]
      %v201 = vld [vmem:[#allocation6 + $0x70] sm:$0xff]
      %v202 = vld [vmem:[#allocation6 + $0x78] sm:$0xff]
      %v203 = vld [vmem:[#allocation6 + $0x80] sm:$0xff]
      %v204 = vld [vmem:[#allocation6 + $0x88] sm:$0xff]
      %v205 = vld [vmem:[#allocation6 + $0x90] sm:$0xff]
      %v206 = vld [vmem:[#allocation6 + $0x98] sm:$0xff]
      %v207 = vld [vmem:[#allocation6 + $0xa0] sm:$0xff]
      %v208 = vld [vmem:[#allocation6 + $0xa8] sm:$0xff]
      %v209 = vld [vmem:[#allocation6 + $0xb0] sm:$0xff]
      %v210 = vld [vmem:[#allocation6 + $0xb8] sm:$0xff]
      %v211 = vld [vmem:[#allocation6 + $0xc0] sm:$0xff]
      %v212 = vld [vmem:[#allocation6 + $0xc8] sm:$0xff]
      %v213 = vld [vmem:[#allocation6 + $0xd0] sm:$0xff]
      %v214 = vld [vmem:[#allocation6 + $0xd8] sm:$0xff]
      %v215 = vld [vmem:[#allocation6 + $0xe0] sm:$0xff]
      %v216 = vld [vmem:[#allocation6 + $0xe8] sm:$0xff]
      %v217 = vld [vmem:[#allocation6 + $0xf0] sm:$0xff]
      %v218 = vld [vmem:[#allocation6 + $0xf8] sm:$0xff]
      %v219 = vld [vmem:[#allocation6 + $0x100] sm:$0xff]
      %v220 = vld [vmem:[#allocation6 + $0x108] sm:$0xff]
      %v221 = vld [vmem:[#allocation6 + $0x110] sm:$0xff]
      %v222 = vld [vmem:[#allocation6 + $0x118] sm:$0xff]
      %v223 = vld [vmem:[#allocation6 + $0x120] sm:$0xff]
      %v224 = vld [vmem:[#allocation6 + $0x128] sm:$0xff]
      %v225 = vld [vmem:[#allocation6 + $0x130] sm:$0xff]
      %v226 = vld [vmem:[#allocation6 + $0x138] sm:$0xff]
      %v227 = vld [vmem:[#allocation6 + $0x140] sm:$0xff]
      %v228 = vld [vmem:[#allocation6 + $0x148] sm:$0xff]
      %v229 = vld [vmem:[#allocation6 + $0x150] sm:$0xff]
      %v230 = vld [vmem:[#allocation6 + $0x158] sm:$0xff]
      %v231 = vld [vmem:[#allocation6 + $0x160] sm:$0xff]
      %v232 = vld [vmem:[#allocation6 + $0x168] sm:$0xff]
      %v233 = vld [vmem:[#allocation6 + $0x170] sm:$0xff]
      %v234 = vld [vmem:[#allocation6 + $0x178] sm:$0xff]
      %v235 = vld [vmem:[#allocation6 + $0x180] sm:$0xff]
      %v236 = vld [vmem:[#allocation6 + $0x188] sm:$0xff]
      %v237 = vld [vmem:[#allocation6 + $0x190] sm:$0xff]
      %v238 = vld [vmem:[#allocation6 + $0x198] sm:$0xff]
      %v239 = vld [vmem:[#allocation6 + $0x1a0] sm:$0xff]
      %v240 = vld [vmem:[#allocation6 + $0x1a8] sm:$0xff]
      %v241 = vld [vmem:[#allocation6 + $0x1b0] sm:$0xff]
      %v242 = vld [vmem:[#allocation6 + $0x1b8] sm:$0xff]
      %v243 = vld [vmem:[#allocation6 + $0x1c0] sm:$0xff]
      %v244 = vld [vmem:[#allocation6 + $0x1c8] sm:$0xff]
      %v245 = vld [vmem:[#allocation6 + $0x1d0] sm:$0xff]
      %v246 = vld [vmem:[#allocation6 + $0x1d8] sm:$0xff]
      %v247 = vld [vmem:[#allocation6 + $0x1e0] sm:$0xff]
      %v248 = vld [vmem:[#allocation6 + $0x1e8] sm:$0xff]
      %v249 = vld [vmem:[#allocation6 + $0x1f0] sm:$0xff]
      %v250 = vld [vmem:[#allocation6 + $0x1f8] sm:$0xff]
      %v251 = vld [vmem:[#allocation6 + $0x200] sm:$0xff]
      %v252 = vld [vmem:[#allocation6 + $0x208] sm:$0xff]
      %v253 = vld [vmem:[#allocation6 + $0x210] sm:$0xff]
      %v254 = vld [vmem:[#allocation6 + $0x218] sm:$0xff]
      %v255 = vld [vmem:[#allocation6 + $0x220] sm:$0xff]
      %v256 = vld [vmem:[#allocation6 + $0x228] sm:$0xff]
      %v257 = vld [vmem:[#allocation6 + $0x230] sm:$0xff]
      %v258 = vld [vmem:[#allocation6 + $0x238] sm:$0xff]
      %v259 = vld [vmem:[#allocation6 + $0x240] sm:$0xff]
      %v260 = vld [vmem:[#allocation6 + $0x248] sm:$0xff]
      %v261 = vld [vmem:[#allocation6 + $0x250] sm:$0xff]
      %v262 = vld [vmem:[#allocation6 + $0x258] sm:$0xff]
      %v263 = vld [vmem:[#allocation6 + $0x260] sm:$0xff]
      %v264 = vld [vmem:[#allocation6 + $0x268] sm:$0xff]
      %v265 = vld [vmem:[#allocation6 + $0x270] sm:$0xff]
      %v266 = vld [vmem:[#allocation6 + $0x278] sm:$0xff]
      %v267 = vld [vmem:[#allocation6 + $0x280] sm:$0xff]
      %v268 = vld [vmem:[#allocation6 + $0x288] sm:$0xff]
      %v269 = vld [vmem:[#allocation6 + $0x290] sm:$0xff]
      %v270 = vld [vmem:[#allocation6 + $0x298] sm:$0xff]
      %v271 = vld [vmem:[#allocation6 + $0x2a0] sm:$0xff]
      %v272 = vld [vmem:[#allocation6 + $0x2a8] sm:$0xff]
      %v273 = vld [vmem:[#allocation6 + $0x2b0] sm:$0xff]
      %v274 = vld [vmem:[#allocation6 + $0x2b8] sm:$0xff]
      %v275 = vld [vmem:[#allocation6 + $0x2c0] sm:$0xff]
      %v276 = vld [vmem:[#allocation6 + $0x2c8] sm:$0xff]
      %v277 = vld [vmem:[#allocation6 + $0x2d0] sm:$0xff]
      %v278 = vld [vmem:[#allocation6 + $0x2d8] sm:$0xff]
      %v279 = vld [vmem:[#allocation6 + $0x2e0] sm:$0xff]
      %v280 = vld [vmem:[#allocation6 + $0x2e8] sm:$0xff]
      %v281 = vld [vmem:[#allocation6 + $0x2f0] sm:$0xff]
      %v282 = vld [vmem:[#allocation6 + $0x2f8] sm:$0xff]
      %v283 = vld [vmem:[#allocation6 + $0x300] sm:$0xff]
      %v284 = vld [vmem:[#allocation6 + $0x308] sm:$0xff]
      %v285 = vld [vmem:[#allocation6 + $0x310] sm:$0xff]
      %v286 = vld [vmem:[#allocation6 + $0x318] sm:$0xff]
      %v287 = vld [vmem:[#allocation6 + $0x320] sm:$0xff]
      %v288 = vld [vmem:[#allocation6 + $0x328] sm:$0xff]
      %v289 = vld [vmem:[#allocation6 + $0x330] sm:$0xff]
      %v290 = vld [vmem:[#allocation6 + $0x338] sm:$0xff]
      %v291 = vld [vmem:[#allocation6 + $0x340] sm:$0xff]
      %v292 = vld [vmem:[#allocation6 + $0x348] sm:$0xff]
      %v293 = vld [vmem:[#allocation6 + $0x350] sm:$0xff]
      %v294 = vld [vmem:[#allocation6 + $0x358] sm:$0xff]
      %v295 = vld [vmem:[#allocation6 + $0x360] sm:$0xff]
      %v296 = vld [vmem:[#allocation6 + $0x368] sm:$0xff]
      %v297 = vld [vmem:[#allocation6 + $0x370] sm:$0xff]
      %v298 = vld [vmem:[#allocation6 + $0x378] sm:$0xff]
      %v299 = vld [vmem:[#allocation6 + $0x380] sm:$0xff]
      %v300 = vld [vmem:[#allocation6 + $0x388] sm:$0xff]
      %v301 = vld [vmem:[#allocation6 + $0x390] sm:$0xff]
      %v302 = vld [vmem:[#allocation6 + $0x398] sm:$0xff]
      %v303 = vld [vmem:[#allocation6 + $0x3a0] sm:$0xff]
      %v304 = vld [vmem:[#allocation6 + $0x3a8] sm:$0xff]
      %v305 = vld [vmem:[#allocation6 + $0x3b0] sm:$0xff]
      %v306 = vld [vmem:[#allocation6 + $0x3b8] sm:$0xff]
      %v307 = vld [vmem:[#allocation6 + $0x3c0] sm:$0xff]
      %v308 = vld [vmem:[#allocation6 + $0x3c8] sm:$0xff]
      %v309 = vld [vmem:[#allocation6 + $0x3d0] sm:$0xff]
      %v310 = vld [vmem:[#allocation6 + $0x3d8] sm:$0xff]
      %v311 = vld [vmem:[#allocation6 + $0x3e0] sm:$0xff]
      %v312 = vld [vmem:[#allocation6 + $0x3e8] sm:$0xff]
      %v313 = vld [vmem:[#allocation6 + $0x3f0] sm:$0xff]
      %v314 = vld [vmem:[#allocation6 + $0x3f8] sm:$0xff]
      %v315 = vld [vmem:[#allocation6 + $0x400] sm:$0xff]
      %v316 = vld [vmem:[#allocation6 + $0x408] sm:$0xff]
      %v317 = vld [vmem:[#allocation6 + $0x410] sm:$0xff]
      %v318 = vld [vmem:[#allocation6 + $0x418] sm:$0xff]
      %v319 = vld [vmem:[#allocation6 + $0x420] sm:$0xff]
      %v320 = vld [vmem:[#allocation6 + $0x428] sm:$0xff]
      %v321 = vld [vmem:[#allocation6 + $0x430] sm:$0xff]
      %v322 = vld [vmem:[#allocation6 + $0x438] sm:$0xff]
      %v323 = vld [vmem:[#allocation6 + $0x440] sm:$0xff]
      %v324 = vld [vmem:[#allocation6 + $0x448] sm:$0xff]
      %v325 = vld [vmem:[#allocation6 + $0x450] sm:$0xff]
      %v326 = vld [vmem:[#allocation6 + $0x458] sm:$0xff]
      %v327 = vld [vmem:[#allocation6 + $0x460] sm:$0xff]
      %v328 = vld [vmem:[#allocation6 + $0x468] sm:$0xff]
      %v329 = vld [vmem:[#allocation6 + $0x470] sm:$0xff]
      %v330 = vld [vmem:[#allocation6 + $0x478] sm:$0xff]
      %v331 = vld [vmem:[#allocation6 + $0x480] sm:$0xff]
      %v332 = vld [vmem:[#allocation6 + $0x488] sm:$0xff]
      %v333 = vld [vmem:[#allocation6 + $0x490] sm:$0xff]
      %v334 = vld [vmem:[#allocation6 + $0x498] sm:$0xff]
      %v335 = vld [vmem:[#allocation6 + $0x4a0] sm:$0xff]
      %v336 = vld [vmem:[#allocation6 + $0x4a8] sm:$0xff]
      %v337 = vld [vmem:[#allocation6 + $0x4b0] sm:$0xff]
      %v338 = vld [vmem:[#allocation6 + $0x4b8] sm:$0xff]
      %v339 = vld [vmem:[#allocation6 + $0x4c0] sm:$0xff]
      %v340 = vld [vmem:[#allocation6 + $0x4c8] sm:$0xff]
      %v341 = vld [vmem:[#allocation6 + $0x4d0] sm:$0xff]
      %v342 = vld [vmem:[#allocation6 + $0x4d8] sm:$0xff]
      %v343 = vld [vmem:[#allocation6 + $0x4e0] sm:$0xff]
      %v344 = vld [vmem:[#allocation6 + $0x4e8] sm:$0xff]
      %v345 = vld [vmem:[#allocation6 + $0x4f0] sm:$0xff]
      %v346 = vld [vmem:[#allocation6 + $0x4f8] sm:$0xff]
      %v347 = vld [vmem:[#allocation6 + $0x500] sm:$0xff]
      %v348 = vld [vmem:[#allocation6 + $0x508] sm:$0xff]
      %v349 = vld [vmem:[#allocation6 + $0x510] sm:$0xff]
      %v350 = vld [vmem:[#allocation6 + $0x518] sm:$0xff]
      %v351 = vld [vmem:[#allocation6 + $0x520] sm:$0xff]
      %v352 = vld [vmem:[#allocation6 + $0x528] sm:$0xff]
      %v353 = vld [vmem:[#allocation6 + $0x530] sm:$0xff]
      %v354 = vld [vmem:[#allocation6 + $0x538] sm:$0xff]
      %v355 = vld [vmem:[#allocation6 + $0x540] sm:$0xff]
      %v356 = vld [vmem:[#allocation6 + $0x548] sm:$0xff]
      %v357 = vld [vmem:[#allocation6 + $0x550] sm:$0xff]
      %v358 = vld [vmem:[#allocation6 + $0x558] sm:$0xff]
      %v359 = vld [vmem:[#allocation6 + $0x560] sm:$0xff]
      %v360 = vld [vmem:[#allocation6 + $0x568] sm:$0xff]
      %v361 = vld [vmem:[#allocation6 + $0x570] sm:$0xff]
      %v362 = vld [vmem:[#allocation6 + $0x578] sm:$0xff]
      %v363 = vld [vmem:[#allocation6 + $0x580] sm:$0xff]
      %v364 = vld [vmem:[#allocation6 + $0x588] sm:$0xff]
      %v365 = vld [vmem:[#allocation6 + $0x590] sm:$0xff]
      %v366 = vld [vmem:[#allocation6 + $0x598] sm:$0xff]
      %v367 = vld [vmem:[#allocation6 + $0x5a0] sm:$0xff]
      %v368 = vld [vmem:[#allocation6 + $0x5a8] sm:$0xff]
      %v369 = vld [vmem:[#allocation6 + $0x5b0] sm:$0xff]
      %v370 = vld [vmem:[#allocation6 + $0x5b8] sm:$0xff]
      %v371 = vld [vmem:[#allocation6 + $0x5c0] sm:$0xff]
      %v372 = vld [vmem:[#allocation6 + $0x5c8] sm:$0xff]
      %v373 = vld [vmem:[#allocation6 + $0x5d0] sm:$0xff]
      %v374 = vld [vmem:[#allocation6 + $0x5d8] sm:$0xff]
      %v375 = vld [vmem:[#allocation6 + $0x5e0] sm:$0xff]
      %v376 = vld [vmem:[#allocation6 + $0x5e8] sm:$0xff]
      %v377 = vld [vmem:[#allocation6 + $0x5f0] sm:$0xff]
      %v378 = vld [vmem:[#allocation6 + $0x5f8] sm:$0xff]
      %v379 = vld [vmem:[#allocation6 + $0x600] sm:$0xff]
      %v380 = vld [vmem:[#allocation6 + $0x608] sm:$0xff]
      %v381 = vld [vmem:[#allocation6 + $0x610] sm:$0xff]
      %v382 = vld [vmem:[#allocation6 + $0x618] sm:$0xff]
      %v383 = vld [vmem:[#allocation6 + $0x620] sm:$0xff]
      %v384 = vld [vmem:[#allocation6 + $0x628] sm:$0xff]
      %v385 = vld [vmem:[#allocation6 + $0x630] sm:$0xff]
      %v386 = vld [vmem:[#allocation6 + $0x638] sm:$0xff]
      %v387 = vld [vmem:[#allocation6 + $0x640] sm:$0xff]
      %v388 = vld [vmem:[#allocation6 + $0x648] sm:$0xff]
      %v389 = vld [vmem:[#allocation6 + $0x650] sm:$0xff]
      %v390 = vld [vmem:[#allocation6 + $0x658] sm:$0xff]
      %v391 = vld [vmem:[#allocation6 + $0x660] sm:$0xff]
      %v392 = vld [vmem:[#allocation6 + $0x668] sm:$0xff]
      %v393 = vld [vmem:[#allocation6 + $0x670] sm:$0xff]
      %v394 = vld [vmem:[#allocation6 + $0x678] sm:$0xff]
      %v395 = vld [vmem:[#allocation6 + $0x680] sm:$0xff]
      %v396 = vld [vmem:[#allocation6 + $0x688] sm:$0xff]
      %v397 = vld [vmem:[#allocation6 + $0x690] sm:$0xff]
      %v398 = vld [vmem:[#allocation6 + $0x698] sm:$0xff]
      %v399 = vld [vmem:[#allocation6 + $0x6a0] sm:$0xff]
      %v400 = vld [vmem:[#allocation6 + $0x6a8] sm:$0xff]
      %v401 = vld [vmem:[#allocation6 + $0x6b0] sm:$0xff]
      %v402 = vld [vmem:[#allocation6 + $0x6b8] sm:$0xff]
      %v403 = vld [vmem:[#allocation6 + $0x6c0] sm:$0xff]
      %v404 = vld [vmem:[#allocation6 + $0x6c8] sm:$0xff]
      %v405 = vld [vmem:[#allocation6 + $0x6d0] sm:$0xff]
      %v406 = vld [vmem:[#allocation6 + $0x6d8] sm:$0xff]
      %v407 = vld [vmem:[#allocation6 + $0x6e0] sm:$0xff]
      %v408 = vld [vmem:[#allocation6 + $0x6e8] sm:$0xff]
      %v409 = vld [vmem:[#allocation6 + $0x6f0] sm:$0xff]
      %v410 = vld [vmem:[#allocation6 + $0x6f8] sm:$0xff]
      %v411 = vld [vmem:[#allocation6 + $0x700] sm:$0xff]
      %v412 = vld [vmem:[#allocation6 + $0x708] sm:$0xff]
      %v413 = vld [vmem:[#allocation6 + $0x710] sm:$0xff]
      %v414 = vld [vmem:[#allocation6 + $0x718] sm:$0xff]
      %v415 = vld [vmem:[#allocation6 + $0x720] sm:$0xff]
      %v416 = vld [vmem:[#allocation6 + $0x728] sm:$0xff]
      %v417 = vld [vmem:[#allocation6 + $0x730] sm:$0xff]
      %v418 = vld [vmem:[#allocation6 + $0x738] sm:$0xff]
      %v419 = vld [vmem:[#allocation6 + $0x740] sm:$0xff]
      %v420 = vld [vmem:[#allocation6 + $0x748] sm:$0xff]
      %v421 = vld [vmem:[#allocation6 + $0x750] sm:$0xff]
      %v422 = vld [vmem:[#allocation6 + $0x758] sm:$0xff]
      %v423 = vld [vmem:[#allocation6 + $0x760] sm:$0xff]
      %v424 = vld [vmem:[#allocation6 + $0x768] sm:$0xff]
      %v425 = vld [vmem:[#allocation6 + $0x770] sm:$0xff]
      %v426 = vld [vmem:[#allocation6 + $0x778] sm:$0xff]
      %v427 = vld [vmem:[#allocation6 + $0x780] sm:$0xff]
      %v428 = vld [vmem:[#allocation6 + $0x788] sm:$0xff]
      %v429 = vld [vmem:[#allocation6 + $0x790] sm:$0xff]
      %v430 = vld [vmem:[#allocation6 + $0x798] sm:$0xff]
      %v431 = vld [vmem:[#allocation6 + $0x7a0] sm:$0xff]
      %v432 = vld [vmem:[#allocation6 + $0x7a8] sm:$0xff]
      %v433 = vld [vmem:[#allocation6 + $0x7b0] sm:$0xff]
      %v434 = vld [vmem:[#allocation6 + $0x7b8] sm:$0xff]
      %v435 = vld [vmem:[#allocation6 + $0x7c0] sm:$0xff]
      %v436 = vld [vmem:[#allocation6 + $0x7c8] sm:$0xff]
      %v437 = vld [vmem:[#allocation6 + $0x7d0] sm:$0xff]
      %v438 = vld [vmem:[#allocation6 + $0x7d8] sm:$0xff]
      %v439 = vld [vmem:[#allocation6 + $0x7e0] sm:$0xff]
      %v440 = vld [vmem:[#allocation6 + $0x7e8] sm:$0xff]
      %v441 = vld [vmem:[#allocation6 + $0x7f0] sm:$0xff]
      %v442 = vld [vmem:[#allocation6 + $0x7f8] sm:$0xff]
      %v443 = vld [vmem:[%s2] sm:$0xf]
      %v445 = vlaneseq
      %v446 = vshrl.u32 %v445, 7
      %v447 = vsub.s32 0, %v446
      %v448 = vrot.slane %v443, %v447
      %v449 = vlaneseq
      %v450 = vshrl.u32 %v449, 7
      %v451 = vsub.s32 1, %v450
      %v452 = vrot.slane %v443, %v451
      %v453 = vlaneseq
      %v454 = vshrl.u32 %v453, 7
      %v455 = vsub.s32 2, %v454
      %v456 = vrot.slane %v443, %v455
      %v457 = vlaneseq
      %v458 = vshrl.u32 %v457, 7
      %v459 = vsub.s32 3, %v458
      %v460 = vrot.slane %v443, %v459
      %v466 = vcombine.high %v186, %v186
      %v468 = vunpack.c.l.s4 1983009808
      %v469 = vunpack.c.0.s8 %v468
      %v470 = vlaneseq
      %v471 = vshrl.u32 %v470, 7
      %v472 = vsub.s32 %v469, %v471
      %v473 = vrot.slane %v186, %v472
      %v475 = vunpack.c.l.s4 1983009808
      %v476 = vunpack.c.0.s8 %v475
      %v477 = vlaneseq
      %v478 = vshrl.u32 %v477, 7
      %v479 = vsub.s32 %v476, %v478
      %v480 = vrot.slane %v466, %v479
      %v481 = vcombine.high %v473, %v473
      %v482 = vcombine.high %v480, %v480
      %487 = vmatprep.subr.mxu0 %v188
      %488 = vmatpush1.msra.mxu0 %v187
      %489 = vmatprep.subr.mxu0 %v192
      %490 = vmatpush1.msra.mxu0 %v191
      %491 = vmatprep.subr.mxu0 %v196
      %492 = vmatpush1.msra.mxu0 %v195
      %493 = vmatprep.subr.mxu0 %v200
      %494 = vmatpush1.msra.mxu0 %v199
      %495 = vmatprep.subr.mxu0 %v204
      %496 = vmatpush1.msra.mxu0 %v203
      %497 = vmatprep.subr.mxu0 %v208
      %498 = vmatpush1.msra.mxu0 %v207
      %499 = vmatprep.subr.mxu0 %v212
      %500 = vmatpush1.msra.mxu0 %v211
      %501 = vmatprep.subr.mxu0 %v216
      %502 = vmatpush1.msra.mxu0 %v215
      %503 = vmatprep.subr.mxu0 %v220
      %504 = vmatpush1.msra.mxu0 %v219
      %505 = vmatprep.subr.mxu0 %v224
      %506 = vmatpush1.msra.mxu0 %v223
      %507 = vmatprep.subr.mxu0 %v228
      %508 = vmatpush1.msra.mxu0 %v227
      %509 = vmatprep.subr.mxu0 %v232
      %510 = vmatpush1.msra.mxu0 %v231
      %511 = vmatprep.subr.mxu0 %v236
      %512 = vmatpush1.msra.mxu0 %v235
      %513 = vmatprep.subr.mxu0 %v240
      %514 = vmatpush1.msra.mxu0 %v239
      %515 = vmatprep.subr.mxu0 %v244
      %516 = vmatpush1.msra.mxu0 %v243
      %517 = vmatprep.subr.mxu0 %v248
      %518 = vmatpush1.msra.mxu0 %v247
      %519 = vmatprep.subr.mxu0 %v252
      %520 = vmatpush1.msra.mxu0 %v251
      %521 = vmatprep.subr.mxu0 %v256
      %522 = vmatpush1.msra.mxu0 %v255
      %523 = vmatprep.subr.mxu0 %v260
      %524 = vmatpush1.msra.mxu0 %v259
      %525 = vmatprep.subr.mxu0 %v264
      %526 = vmatpush1.msra.mxu0 %v263
      %527 = vmatprep.subr.mxu0 %v268
      %528 = vmatpush1.msra.mxu0 %v267
      %529 = vmatprep.subr.mxu0 %v272
      %530 = vmatpush1.msra.mxu0 %v271
      %531 = vmatprep.subr.mxu0 %v276
      %532 = vmatpush1.msra.mxu0 %v275
      %533 = vmatprep.subr.mxu0 %v280
      %534 = vmatpush1.msra.mxu0 %v279
      %535 = vmatprep.subr.mxu0 %v284
      %536 = vmatpush1.msra.mxu0 %v283
      %537 = vmatprep.subr.mxu0 %v288
      %538 = vmatpush1.msra.mxu0 %v287
      %539 = vmatprep.subr.mxu0 %v292
      %540 = vmatpush1.msra.mxu0 %v291
      %541 = vmatprep.subr.mxu0 %v296
      %542 = vmatpush1.msra.mxu0 %v295
      %543 = vmatprep.subr.mxu0 %v300
      %544 = vmatpush1.msra.mxu0 %v299
      %545 = vmatprep.subr.mxu0 %v304
      %546 = vmatpush1.msra.mxu0 %v303
      %547 = vmatprep.subr.mxu0 %v308
      %548 = vmatpush1.msra.mxu0 %v307
      %549 = vmatprep.subr.mxu0 %v312
      %550 = vmatpush1.msra.mxu0 %v311
      %551 = vmatprep.mubr.f32.mxu0 %v481
      %552 = vmatmul.mubr.f32.gmra.mrb[0].mxu0 %v473
      %v553 = vpop.f32.mrb[0].mxu0
      %v554 = vadd.f32 %v448, %v553
      %v555 = vpop.f32.mrb[0].mxu0
      %v556 = vadd.f32 %v452, %v555
      %557 = vdwg.mxu0
      %558 = vmatprep.subr.mxu0 %v316
      %559 = vmatpush1.msra.mxu0 %v315
      %560 = vmatprep.subr.mxu0 %v320
      %561 = vmatpush1.msra.mxu0 %v319
      %562 = vmatprep.subr.mxu0 %v324
      %563 = vmatpush1.msra.mxu0 %v323
      %564 = vmatprep.subr.mxu0 %v328
      %565 = vmatpush1.msra.mxu0 %v327
      %566 = vmatprep.subr.mxu0 %v332
      %567 = vmatpush1.msra.mxu0 %v331
      %568 = vmatprep.subr.mxu0 %v336
      %569 = vmatpush1.msra.mxu0 %v335
      %570 = vmatprep.subr.mxu0 %v340
      %571 = vmatpush1.msra.mxu0 %v339
      %572 = vmatprep.subr.mxu0 %v344
      %573 = vmatpush1.msra.mxu0 %v343
      %574 = vmatprep.subr.mxu0 %v348
      %575 = vmatpush1.msra.mxu0 %v347
      %576 = vmatprep.subr.mxu0 %v352
      %577 = vmatpush1.msra.mxu0 %v351
      %578 = vmatprep.subr.mxu0 %v356
      %579 = vmatpush1.msra.mxu0 %v355
      %580 = vmatprep.subr.mxu0 %v360
      %581 = vmatpush1.msra.mxu0 %v359
      %582 = vmatprep.subr.mxu0 %v364
      %583 = vmatpush1.msra.mxu0 %v363
      %584 = vmatprep.subr.mxu0 %v368
      %585 = vmatpush1.msra.mxu0 %v367
      %586 = vmatprep.subr.mxu0 %v372
      %587 = vmatpush1.msra.mxu0 %v371
      %588 = vmatprep.subr.mxu0 %v376
      %589 = vmatpush1.msra.mxu0 %v375
      %590 = vmatprep.subr.mxu0 %v380
      %591 = vmatpush1.msra.mxu0 %v379
      %592 = vmatprep.subr.mxu0 %v384
      %593 = vmatpush1.msra.mxu0 %v383
      %594 = vmatprep.subr.mxu0 %v388
      %595 = vmatpush1.msra.mxu0 %v387
      %596 = vmatprep.subr.mxu0 %v392
      %597 = vmatpush1.msra.mxu0 %v391
      %598 = vmatprep.subr.mxu0 %v396
      %599 = vmatpush1.msra.mxu0 %v395
      %600 = vmatprep.subr.mxu0 %v400
      %601 = vmatpush1.msra.mxu0 %v399
      %602 = vmatprep.subr.mxu0 %v404
      %603 = vmatpush1.msra.mxu0 %v403
      %604 = vmatprep.subr.mxu0 %v408
      %605 = vmatpush1.msra.mxu0 %v407
      %606 = vmatprep.subr.mxu0 %v412
      %607 = vmatpush1.msra.mxu0 %v411
      %608 = vmatprep.subr.mxu0 %v416
      %609 = vmatpush1.msra.mxu0 %v415
      %610 = vmatprep.subr.mxu0 %v420
      %611 = vmatpush1.msra.mxu0 %v419
      %612 = vmatprep.subr.mxu0 %v424
      %613 = vmatpush1.msra.mxu0 %v423
      %614 = vmatprep.subr.mxu0 %v428
      %615 = vmatpush1.msra.mxu0 %v427
      %616 = vmatprep.subr.mxu0 %v432
      %617 = vmatpush1.msra.mxu0 %v431
      %618 = vmatprep.subr.mxu0 %v436
      %619 = vmatpush1.msra.mxu0 %v435
      %620 = vmatprep.subr.mxu0 %v440
      %621 = vmatpush1.msra.mxu0 %v439
      %622 = vmatprep.mubr.f32.mxu0 %v482
      %623 = vmatmul.mubr.f32.gmra.mrb[0].mxu0 %v480
      %v624 = vpop.f32.mrb[0].mxu0
      %v625 = vadd.f32 %v554, %v624
      %v626 = vpop.f32.mrb[0].mxu0
      %v627 = vadd.f32 %v556, %v626
      %628 = vdwg.mxu0
      %629 = vmatprep.subr.mxu0 %v190
      %630 = vmatpush1.msra.mxu0 %v189
      %631 = vmatprep.subr.mxu0 %v194
      %632 = vmatpush1.msra.mxu0 %v193
      %633 = vmatprep.subr.mxu0 %v198
      %634 = vmatpush1.msra.mxu0 %v197
      %635 = vmatprep.subr.mxu0 %v202
      %636 = vmatpush1.msra.mxu0 %v201
      %637 = vmatprep.subr.mxu0 %v206
      %638 = vmatpush1.msra.mxu0 %v205
      %639 = vmatprep.subr.mxu0 %v210
      %640 = vmatpush1.msra.mxu0 %v209
      %641 = vmatprep.subr.mxu0 %v214
      %642 = vmatpush1.msra.mxu0 %v213
      %643 = vmatprep.subr.mxu0 %v218
      %644 = vmatpush1.msra.mxu0 %v217
      %645 = vmatprep.subr.mxu0 %v222
      %646 = vmatpush1.msra.mxu0 %v221
      %647 = vmatprep.subr.mxu0 %v226
      %648 = vmatpush1.msra.mxu0 %v225
      %649 = vmatprep.subr.mxu0 %v230
      %650 = vmatpush1.msra.mxu0 %v229
      %651 = vmatprep.subr.mxu0 %v234
      %652 = vmatpush1.msra.mxu0 %v233
      %653 = vmatprep.subr.mxu0 %v238
      %654 = vmatpush1.msra.mxu0 %v237
      %655 = vmatprep.subr.mxu0 %v242
      %656 = vmatpush1.msra.mxu0 %v241
      %657 = vmatprep.subr.mxu0 %v246
      %658 = vmatpush1.msra.mxu0 %v245
      %659 = vmatprep.subr.mxu0 %v250
      %660 = vmatpush1.msra.mxu0 %v249
      %661 = vmatprep.subr.mxu0 %v254
      %662 = vmatpush1.msra.mxu0 %v253
      %663 = vmatprep.subr.mxu0 %v258
      %664 = vmatpush1.msra.mxu0 %v257
      %665 = vmatprep.subr.mxu0 %v262
      %666 = vmatpush1.msra.mxu0 %v261
      %667 = vmatprep.subr.mxu0 %v266
      %668 = vmatpush1.msra.mxu0 %v265
      %669 = vmatprep.subr.mxu0 %v270
      %670 = vmatpush1.msra.mxu0 %v269
      %671 = vmatprep.subr.mxu0 %v274
      %672 = vmatpush1.msra.mxu0 %v273
      %673 = vmatprep.subr.mxu0 %v278
      %674 = vmatpush1.msra.mxu0 %v277
      %675 = vmatprep.subr.mxu0 %v282
      %676 = vmatpush1.msra.mxu0 %v281
      %677 = vmatprep.subr.mxu0 %v286
      %678 = vmatpush1.msra.mxu0 %v285
      %679 = vmatprep.subr.mxu0 %v290
      %680 = vmatpush1.msra.mxu0 %v289
      %681 = vmatprep.subr.mxu0 %v294
      %682 = vmatpush1.msra.mxu0 %v293
      %683 = vmatprep.subr.mxu0 %v298
      %684 = vmatpush1.msra.mxu0 %v297
      %685 = vmatprep.subr.mxu0 %v302
      %686 = vmatpush1.msra.mxu0 %v301
      %687 = vmatprep.subr.mxu0 %v306
      %688 = vmatpush1.msra.mxu0 %v305
      %689 = vmatprep.subr.mxu0 %v310
      %690 = vmatpush1.msra.mxu0 %v309
      %691 = vmatprep.subr.mxu0 %v314
      %692 = vmatpush1.msra.mxu0 %v313
      %693 = vmatprep.mubr.f32.mxu0 %v481
      %694 = vmatmul.mubr.f32.gmra.mrb[0].mxu0 %v473
      %v695 = vpop.f32.mrb[0].mxu0
      %v696 = vadd.f32 %v456, %v695
      %v697 = vpop.f32.mrb[0].mxu0
      %v698 = vadd.f32 %v460, %v697
      %699 = vdwg.mxu0
      %700 = vmatprep.subr.mxu0 %v318
      %701 = vmatpush1.msra.mxu0 %v317
      %702 = vmatprep.subr.mxu0 %v322
      %703 = vmatpush1.msra.mxu0 %v321
      %704 = vmatprep.subr.mxu0 %v326
      %705 = vmatpush1.msra.mxu0 %v325
      %706 = vmatprep.subr.mxu0 %v330
      %707 = vmatpush1.msra.mxu0 %v329
      %708 = vmatprep.subr.mxu0 %v334
      %709 = vmatpush1.msra.mxu0 %v333
      %710 = vmatprep.subr.mxu0 %v338
      %711 = vmatpush1.msra.mxu0 %v337
      %712 = vmatprep.subr.mxu0 %v342
      %713 = vmatpush1.msra.mxu0 %v341
      %714 = vmatprep.subr.mxu0 %v346
      %715 = vmatpush1.msra.mxu0 %v345
      %716 = vmatprep.subr.mxu0 %v350
      %717 = vmatpush1.msra.mxu0 %v349
      %718 = vmatprep.subr.mxu0 %v354
      %719 = vmatpush1.msra.mxu0 %v353
      %720 = vmatprep.subr.mxu0 %v358
      %721 = vmatpush1.msra.mxu0 %v357
      %722 = vmatprep.subr.mxu0 %v362
      %723 = vmatpush1.msra.mxu0 %v361
      %724 = vmatprep.subr.mxu0 %v366
      %725 = vmatpush1.msra.mxu0 %v365
      %726 = vmatprep.subr.mxu0 %v370
      %727 = vmatpush1.msra.mxu0 %v369
      %728 = vmatprep.subr.mxu0 %v374
      %729 = vmatpush1.msra.mxu0 %v373
      %730 = vmatprep.subr.mxu0 %v378
      %731 = vmatpush1.msra.mxu0 %v377
      %732 = vmatprep.subr.mxu0 %v382
      %733 = vmatpush1.msra.mxu0 %v381
      %734 = vmatprep.subr.mxu0 %v386
      %735 = vmatpush1.msra.mxu0 %v385
      %736 = vmatprep.subr.mxu0 %v390
      %737 = vmatpush1.msra.mxu0 %v389
      %738 = vmatprep.subr.mxu0 %v394
      %739 = vmatpush1.msra.mxu0 %v393
      %740 = vmatprep.subr.mxu0 %v398
      %741 = vmatpush1.msra.mxu0 %v397
      %742 = vmatprep.subr.mxu0 %v402
      %743 = vmatpush1.msra.mxu0 %v401
      %744 = vmatprep.subr.mxu0 %v406
      %745 = vmatpush1.msra.mxu0 %v405
      %746 = vmatprep.subr.mxu0 %v410
      %747 = vmatpush1.msra.mxu0 %v409
      %748 = vmatprep.subr.mxu0 %v414
      %749 = vmatpush1.msra.mxu0 %v413
      %750 = vmatprep.subr.mxu0 %v418
      %751 = vmatpush1.msra.mxu0 %v417
      %752 = vmatprep.subr.mxu0 %v422
      %753 = vmatpush1.msra.mxu0 %v421
      %754 = vmatprep.subr.mxu0 %v426
      %755 = vmatpush1.msra.mxu0 %v425
      %756 = vmatprep.subr.mxu0 %v430
      %757 = vmatpush1.msra.mxu0 %v429
      %758 = vmatprep.subr.mxu0 %v434
      %759 = vmatpush1.msra.mxu0 %v433
      %760 = vmatprep.subr.mxu0 %v438
      %761 = vmatpush1.msra.mxu0 %v437
      %762 = vmatprep.subr.mxu0 %v442
      %763 = vmatpush1.msra.mxu0 %v441
      %764 = vmatprep.mubr.f32.mxu0 %v482
      %765 = vmatmul.mubr.f32.gmra.mrb[0].mxu0 %v480
      %v766 = vpop.f32.mrb[0].mxu0
      %v767 = vadd.f32 %v696, %v766
      %v768 = vpop.f32.mrb[0].mxu0
      %v769 = vadd.f32 %v698, %v768
      %770 = vdwg.mxu0
      %v771 = vmax.f32 %v625, 0.0
      %v772 = vmax.f32 %v627, 0.0
      %v773 = vmax.f32 %v767, 0.0
      %v774 = vmax.f32 %v769, 0.0
      %v775 = vld [vmem:[#allocation8] sm:$0xff]
      %v776 = vld [vmem:[#allocation8 + $0x8] sm:$0xff]
      %v777 = vld [vmem:[#allocation8 + $0x10] sm:$0xff]
      %v778 = vld [vmem:[#allocation8 + $0x18] sm:$0xff]
      %v779 = vld [vmem:[#allocation8 + $0x20] sm:$0xff]
      %v780 = vld [vmem:[#allocation8 + $0x28] sm:$0xff]
      %v781 = vld [vmem:[#allocation8 + $0x30] sm:$0xff]
      %v782 = vld [vmem:[#allocation8 + $0x38] sm:$0xff]
      %v783 = vld [vmem:[#allocation8 + $0x40] sm:$0xff]
      %v784 = vld [vmem:[#allocation8 + $0x48] sm:$0xff]
      %v785 = vld [vmem:[#allocation8 + $0x50] sm:$0xff]
      %v786 = vld [vmem:[#allocation8 + $0x58] sm:$0xff]
      %v787 = vld [vmem:[#allocation8 + $0x60] sm:$0xff]
      %v788 = vld [vmem:[#allocation8 + $0x68] sm:$0xff]
      %v789 = vld [vmem:[#allocation8 + $0x70] sm:$0xff]
      %v790 = vld [vmem:[#allocation8 + $0x78] sm:$0xff]
      %v791 = vld [vmem:[#allocation8 + $0x80] sm:$0xff]
      %v792 = vld [vmem:[#allocation8 + $0x88] sm:$0xff]
      %v793 = vld [vmem:[#allocation8 + $0x90] sm:$0xff]
      %v794 = vld [vmem:[#allocation8 + $0x98] sm:$0xff]
      %v795 = vld [vmem:[#allocation8 + $0xa0] sm:$0xff]
      %v796 = vld [vmem:[#allocation8 + $0xa8] sm:$0xff]
      %v797 = vld [vmem:[#allocation8 + $0xb0] sm:$0xff]
      %v798 = vld [vmem:[#allocation8 + $0xb8] sm:$0xff]
      %v799 = vld [vmem:[#allocation8 + $0xc0] sm:$0xff]
      %v800 = vld [vmem:[#allocation8 + $0xc8] sm:$0xff]
      %v801 = vld [vmem:[#allocation8 + $0xd0] sm:$0xff]
      %v802 = vld [vmem:[#allocation8 + $0xd8] sm:$0xff]
      %v803 = vld [vmem:[#allocation8 + $0xe0] sm:$0xff]
      %v804 = vld [vmem:[#allocation8 + $0xe8] sm:$0xff]
      %v805 = vld [vmem:[#allocation8 + $0xf0] sm:$0xff]
      %v806 = vld [vmem:[#allocation8 + $0xf8] sm:$0xff]
      %v807 = vld [vmem:[#allocation8 + $0x100] sm:$0xff]
      %v808 = vld [vmem:[#allocation8 + $0x108] sm:$0xff]
      %v809 = vld [vmem:[#allocation8 + $0x110] sm:$0xff]
      %v810 = vld [vmem:[#allocation8 + $0x118] sm:$0xff]
      %v811 = vld [vmem:[#allocation8 + $0x120] sm:$0xff]
      %v812 = vld [vmem:[#allocation8 + $0x128] sm:$0xff]
      %v813 = vld [vmem:[#allocation8 + $0x130] sm:$0xff]
      %v814 = vld [vmem:[#allocation8 + $0x138] sm:$0xff]
      %v815 = vld [vmem:[#allocation8 + $0x140] sm:$0xff]
      %v816 = vld [vmem:[#allocation8 + $0x148] sm:$0xff]
      %v817 = vld [vmem:[#allocation8 + $0x150] sm:$0xff]
      %v818 = vld [vmem:[#allocation8 + $0x158] sm:$0xff]
      %v819 = vld [vmem:[#allocation8 + $0x160] sm:$0xff]
      %v820 = vld [vmem:[#allocation8 + $0x168] sm:$0xff]
      %v821 = vld [vmem:[#allocation8 + $0x170] sm:$0xff]
      %v822 = vld [vmem:[#allocation8 + $0x178] sm:$0xff]
      %v823 = vld [vmem:[#allocation8 + $0x180] sm:$0xff]
      %v824 = vld [vmem:[#allocation8 + $0x188] sm:$0xff]
      %v825 = vld [vmem:[#allocation8 + $0x190] sm:$0xff]
      %v826 = vld [vmem:[#allocation8 + $0x198] sm:$0xff]
      %v827 = vld [vmem:[#allocation8 + $0x1a0] sm:$0xff]
      %v828 = vld [vmem:[#allocation8 + $0x1a8] sm:$0xff]
      %v829 = vld [vmem:[#allocation8 + $0x1b0] sm:$0xff]
      %v830 = vld [vmem:[#allocation8 + $0x1b8] sm:$0xff]
      %v831 = vld [vmem:[#allocation8 + $0x1c0] sm:$0xff]
      %v832 = vld [vmem:[#allocation8 + $0x1c8] sm:$0xff]
      %v833 = vld [vmem:[#allocation8 + $0x1d0] sm:$0xff]
      %v834 = vld [vmem:[#allocation8 + $0x1d8] sm:$0xff]
      %v835 = vld [vmem:[#allocation8 + $0x1e0] sm:$0xff]
      %v836 = vld [vmem:[#allocation8 + $0x1e8] sm:$0xff]
      %v837 = vld [vmem:[#allocation8 + $0x1f0] sm:$0xff]
      %v838 = vld [vmem:[#allocation8 + $0x1f8] sm:$0xff]
      %v839 = vld [vmem:[#allocation8 + $0x200] sm:$0xff]
      %v840 = vld [vmem:[#allocation8 + $0x208] sm:$0xff]
      %v841 = vld [vmem:[#allocation8 + $0x210] sm:$0xff]
      %v842 = vld [vmem:[#allocation8 + $0x218] sm:$0xff]
      %v843 = vld [vmem:[#allocation8 + $0x220] sm:$0xff]
      %v844 = vld [vmem:[#allocation8 + $0x228] sm:$0xff]
      %v845 = vld [vmem:[#allocation8 + $0x230] sm:$0xff]
      %v846 = vld [vmem:[#allocation8 + $0x238] sm:$0xff]
      %v847 = vld [vmem:[#allocation8 + $0x240] sm:$0xff]
      %v848 = vld [vmem:[#allocation8 + $0x248] sm:$0xff]
      %v849 = vld [vmem:[#allocation8 + $0x250] sm:$0xff]
      %v850 = vld [vmem:[#allocation8 + $0x258] sm:$0xff]
      %v851 = vld [vmem:[#allocation8 + $0x260] sm:$0xff]
      %v852 = vld [vmem:[#allocation8 + $0x268] sm:$0xff]
      %v853 = vld [vmem:[#allocation8 + $0x270] sm:$0xff]
      %v854 = vld [vmem:[#allocation8 + $0x278] sm:$0xff]
      %v855 = vld [vmem:[#allocation8 + $0x280] sm:$0xff]
      %v856 = vld [vmem:[#allocation8 + $0x288] sm:$0xff]
      %v857 = vld [vmem:[#allocation8 + $0x290] sm:$0xff]
      %v858 = vld [vmem:[#allocation8 + $0x298] sm:$0xff]
      %v859 = vld [vmem:[#allocation8 + $0x2a0] sm:$0xff]
      %v860 = vld [vmem:[#allocation8 + $0x2a8] sm:$0xff]
      %v861 = vld [vmem:[#allocation8 + $0x2b0] sm:$0xff]
      %v862 = vld [vmem:[#allocation8 + $0x2b8] sm:$0xff]
      %v863 = vld [vmem:[#allocation8 + $0x2c0] sm:$0xff]
      %v864 = vld [vmem:[#allocation8 + $0x2c8] sm:$0xff]
      %v865 = vld [vmem:[#allocation8 + $0x2d0] sm:$0xff]
      %v866 = vld [vmem:[#allocation8 + $0x2d8] sm:$0xff]
      %v867 = vld [vmem:[#allocation8 + $0x2e0] sm:$0xff]
      %v868 = vld [vmem:[#allocation8 + $0x2e8] sm:$0xff]
      %v869 = vld [vmem:[#allocation8 + $0x2f0] sm:$0xff]
      %v870 = vld [vmem:[#allocation8 + $0x2f8] sm:$0xff]
      %v871 = vld [vmem:[#allocation8 + $0x300] sm:$0xff]
      %v872 = vld [vmem:[#allocation8 + $0x308] sm:$0xff]
      %v873 = vld [vmem:[#allocation8 + $0x310] sm:$0xff]
      %v874 = vld [vmem:[#allocation8 + $0x318] sm:$0xff]
      %v875 = vld [vmem:[#allocation8 + $0x320] sm:$0xff]
      %v876 = vld [vmem:[#allocation8 + $0x328] sm:$0xff]
      %v877 = vld [vmem:[#allocation8 + $0x330] sm:$0xff]
      %v878 = vld [vmem:[#allocation8 + $0x338] sm:$0xff]
      %v879 = vld [vmem:[#allocation8 + $0x340] sm:$0xff]
      %v880 = vld [vmem:[#allocation8 + $0x348] sm:$0xff]
      %v881 = vld [vmem:[#allocation8 + $0x350] sm:$0xff]
      %v882 = vld [vmem:[#allocation8 + $0x358] sm:$0xff]
      %v883 = vld [vmem:[#allocation8 + $0x360] sm:$0xff]
      %v884 = vld [vmem:[#allocation8 + $0x368] sm:$0xff]
      %v885 = vld [vmem:[#allocation8 + $0x370] sm:$0xff]
      %v886 = vld [vmem:[#allocation8 + $0x378] sm:$0xff]
      %v887 = vld [vmem:[#allocation8 + $0x380] sm:$0xff]
      %v888 = vld [vmem:[#allocation8 + $0x388] sm:$0xff]
      %v889 = vld [vmem:[#allocation8 + $0x390] sm:$0xff]
      %v890 = vld [vmem:[#allocation8 + $0x398] sm:$0xff]
      %v891 = vld [vmem:[#allocation8 + $0x3a0] sm:$0xff]
      %v892 = vld [vmem:[#allocation8 + $0x3a8] sm:$0xff]
      %v893 = vld [vmem:[#allocation8 + $0x3b0] sm:$0xff]
      %v894 = vld [vmem:[#allocation8 + $0x3b8] sm:$0xff]
      %v895 = vld [vmem:[#allocation8 + $0x3c0] sm:$0xff]
      %v896 = vld [vmem:[#allocation8 + $0x3c8] sm:$0xff]
      %v897 = vld [vmem:[#allocation8 + $0x3d0] sm:$0xff]
      %v898 = vld [vmem:[#allocation8 + $0x3d8] sm:$0xff]
      %v899 = vld [vmem:[#allocation8 + $0x3e0] sm:$0xff]
      %v900 = vld [vmem:[#allocation8 + $0x3e8] sm:$0xff]
      %v901 = vld [vmem:[#allocation8 + $0x3f0] sm:$0xff]
      %v902 = vld [vmem:[#allocation8 + $0x3f8] sm:$0xff]
      %v903 = vld [vmem:[#allocation8 + $0x400] sm:$0xff]
      %v904 = vld [vmem:[#allocation8 + $0x408] sm:$0xff]
      %v905 = vld [vmem:[#allocation8 + $0x410] sm:$0xff]
      %v906 = vld [vmem:[#allocation8 + $0x418] sm:$0xff]
      %v907 = vld [vmem:[#allocation8 + $0x420] sm:$0xff]
      %v908 = vld [vmem:[#allocation8 + $0x428] sm:$0xff]
      %v909 = vld [vmem:[#allocation8 + $0x430] sm:$0xff]
      %v910 = vld [vmem:[#allocation8 + $0x438] sm:$0xff]
      %v911 = vld [vmem:[#allocation8 + $0x440] sm:$0xff]
      %v912 = vld [vmem:[#allocation8 + $0x448] sm:$0xff]
      %v913 = vld [vmem:[#allocation8 + $0x450] sm:$0xff]
      %v914 = vld [vmem:[#allocation8 + $0x458] sm:$0xff]
      %v915 = vld [vmem:[#allocation8 + $0x460] sm:$0xff]
      %v916 = vld [vmem:[#allocation8 + $0x468] sm:$0xff]
      %v917 = vld [vmem:[#allocation8 + $0x470] sm:$0xff]
      %v918 = vld [vmem:[#allocation8 + $0x478] sm:$0xff]
      %v919 = vld [vmem:[#allocation8 + $0x480] sm:$0xff]
      %v920 = vld [vmem:[#allocation8 + $0x488] sm:$0xff]
      %v921 = vld [vmem:[#allocation8 + $0x490] sm:$0xff]
      %v922 = vld [vmem:[#allocation8 + $0x498] sm:$0xff]
      %v923 = vld [vmem:[#allocation8 + $0x4a0] sm:$0xff]
      %v924 = vld [vmem:[#allocation8 + $0x4a8] sm:$0xff]
      %v925 = vld [vmem:[#allocation8 + $0x4b0] sm:$0xff]
      %v926 = vld [vmem:[#allocation8 + $0x4b8] sm:$0xff]
      %v927 = vld [vmem:[#allocation8 + $0x4c0] sm:$0xff]
      %v928 = vld [vmem:[#allocation8 + $0x4c8] sm:$0xff]
      %v929 = vld [vmem:[#allocation8 + $0x4d0] sm:$0xff]
      %v930 = vld [vmem:[#allocation8 + $0x4d8] sm:$0xff]
      %v931 = vld [vmem:[#allocation8 + $0x4e0] sm:$0xff]
      %v932 = vld [vmem:[#allocation8 + $0x4e8] sm:$0xff]
      %v933 = vld [vmem:[#allocation8 + $0x4f0] sm:$0xff]
      %v934 = vld [vmem:[#allocation8 + $0x4f8] sm:$0xff]
      %v935 = vld [vmem:[#allocation8 + $0x500] sm:$0xff]
      %v936 = vld [vmem:[#allocation8 + $0x508] sm:$0xff]
      %v937 = vld [vmem:[#allocation8 + $0x510] sm:$0xff]
      %v938 = vld [vmem:[#allocation8 + $0x518] sm:$0xff]
      %v939 = vld [vmem:[#allocation8 + $0x520] sm:$0xff]
      %v940 = vld [vmem:[#allocation8 + $0x528] sm:$0xff]
      %v941 = vld [vmem:[#allocation8 + $0x530] sm:$0xff]
      %v942 = vld [vmem:[#allocation8 + $0x538] sm:$0xff]
      %v943 = vld [vmem:[#allocation8 + $0x540] sm:$0xff]
      %v944 = vld [vmem:[#allocation8 + $0x548] sm:$0xff]
      %v945 = vld [vmem:[#allocation8 + $0x550] sm:$0xff]
      %v946 = vld [vmem:[#allocation8 + $0x558] sm:$0xff]
      %v947 = vld [vmem:[#allocation8 + $0x560] sm:$0xff]
      %v948 = vld [vmem:[#allocation8 + $0x568] sm:$0xff]
      %v949 = vld [vmem:[#allocation8 + $0x570] sm:$0xff]
      %v950 = vld [vmem:[#allocation8 + $0x578] sm:$0xff]
      %v951 = vld [vmem:[#allocation8 + $0x580] sm:$0xff]
      %v952 = vld [vmem:[#allocation8 + $0x588] sm:$0xff]
      %v953 = vld [vmem:[#allocation8 + $0x590] sm:$0xff]
      %v954 = vld [vmem:[#allocation8 + $0x598] sm:$0xff]
      %v955 = vld [vmem:[#allocation8 + $0x5a0] sm:$0xff]
      %v956 = vld [vmem:[#allocation8 + $0x5a8] sm:$0xff]
      %v957 = vld [vmem:[#allocation8 + $0x5b0] sm:$0xff]
      %v958 = vld [vmem:[#allocation8 + $0x5b8] sm:$0xff]
      %v959 = vld [vmem:[#allocation8 + $0x5c0] sm:$0xff]
      %v960 = vld [vmem:[#allocation8 + $0x5c8] sm:$0xff]
      %v961 = vld [vmem:[#allocation8 + $0x5d0] sm:$0xff]
      %v962 = vld [vmem:[#allocation8 + $0x5d8] sm:$0xff]
      %v963 = vld [vmem:[#allocation8 + $0x5e0] sm:$0xff]
      %v964 = vld [vmem:[#allocation8 + $0x5e8] sm:$0xff]
      %v965 = vld [vmem:[#allocation8 + $0x5f0] sm:$0xff]
      %v966 = vld [vmem:[#allocation8 + $0x5f8] sm:$0xff]
      %v967 = vld [vmem:[%s4] sm:$0x7]
      %v969 = vlaneseq
      %v970 = vshrl.u32 %v969, 7
      %v971 = vsub.s32 0, %v970
      %v972 = vrot.slane %v967, %v971
      %v973 = vlaneseq
      %v974 = vshrl.u32 %v973, 7
      %v975 = vsub.s32 1, %v974
      %v976 = vrot.slane %v967, %v975
      %v977 = vlaneseq
      %v978 = vshrl.u32 %v977, 7
      %v979 = vsub.s32 2, %v978
      %v980 = vrot.slane %v967, %v979
      %984 = vmatprep.subr.mxu0 %v776
      %985 = vmatpush1.msra.mxu0 %v775
      %986 = vmatprep.subr.mxu0 %v779
      %987 = vmatpush1.msra.mxu0 %v778
      %988 = vmatprep.subr.mxu0 %v782
      %989 = vmatpush1.msra.mxu0 %v781
      %990 = vmatprep.subr.mxu0 %v785
      %991 = vmatpush1.msra.mxu0 %v784
      %992 = vmatprep.subr.mxu0 %v788
      %993 = vmatpush1.msra.mxu0 %v787
      %994 = vmatprep.subr.mxu0 %v791
      %995 = vmatpush1.msra.mxu0 %v790
      %996 = vmatprep.subr.mxu0 %v794
      %997 = vmatpush1.msra.mxu0 %v793
      %998 = vmatprep.subr.mxu0 %v797
      %999 = vmatpush1.msra.mxu0 %v796
      %1000 = vmatprep.subr.mxu0 %v800
      %1001 = vmatpush1.msra.mxu0 %v799
      %1002 = vmatprep.subr.mxu0 %v803
      %1003 = vmatpush1.msra.mxu0 %v802
      %1004 = vmatprep.subr.mxu0 %v806
      %1005 = vmatpush1.msra.mxu0 %v805
      %1006 = vmatprep.subr.mxu0 %v809
      %1007 = vmatpush1.msra.mxu0 %v808
      %1008 = vmatprep.subr.mxu0 %v812
      %1009 = vmatpush1.msra.mxu0 %v811
      %1010 = vmatprep.subr.mxu0 %v815
      %1011 = vmatpush1.msra.mxu0 %v814
      %1012 = vmatprep.subr.mxu0 %v818
      %1013 = vmatpush1.msra.mxu0 %v817
      %1014 = vmatprep.subr.mxu0 %v821
      %1015 = vmatpush1.msra.mxu0 %v820
      %1016 = vmatprep.subr.mxu0 %v824
      %1017 = vmatpush1.msra.mxu0 %v823
      %1018 = vmatprep.subr.mxu0 %v827
      %1019 = vmatpush1.msra.mxu0 %v826
      %1020 = vmatprep.subr.mxu0 %v830
      %1021 = vmatpush1.msra.mxu0 %v829
      %1022 = vmatprep.subr.mxu0 %v833
      %1023 = vmatpush1.msra.mxu0 %v832
      %1024 = vmatprep.subr.mxu0 %v836
      %1025 = vmatpush1.msra.mxu0 %v835
      %1026 = vmatprep.subr.mxu0 %v839
      %1027 = vmatpush1.msra.mxu0 %v838
      %1028 = vmatprep.subr.mxu0 %v842
      %1029 = vmatpush1.msra.mxu0 %v841
      %1030 = vmatprep.subr.mxu0 %v845
      %1031 = vmatpush1.msra.mxu0 %v844
      %1032 = vmatprep.subr.mxu0 %v848
      %1033 = vmatpush1.msra.mxu0 %v847
      %1034 = vmatprep.subr.mxu0 %v851
      %1035 = vmatpush1.msra.mxu0 %v850
      %1036 = vmatprep.subr.mxu0 %v854
      %1037 = vmatpush1.msra.mxu0 %v853
      %1038 = vmatprep.subr.mxu0 %v857
      %1039 = vmatpush1.msra.mxu0 %v856
      %1040 = vmatprep.subr.mxu0 %v860
      %1041 = vmatpush1.msra.mxu0 %v859
      %1042 = vmatprep.subr.mxu0 %v863
      %1043 = vmatpush1.msra.mxu0 %v862
      %1044 = vmatprep.subr.mxu0 %v866
      %1045 = vmatpush1.msra.mxu0 %v865
      %1046 = vmatprep.subr.mxu0 %v869
      %1047 = vmatpush1.msra.mxu0 %v868
      %1048 = vmatprep.mubr.f32.mxu0 %v772
      %1049 = vmatmul.mubr.f32.gmra.mrb[0].mxu0 %v771
      %v1050 = vpop.f32.mrb[0].mxu0
      %v1051 = vadd.f32 %v972, %v1050
      %v1052 = vpop.f32.mrb[0].mxu0
      %v1053 = vadd.f32 %v976, %v1052
      %1054 = vdwg.mxu0
      %1055 = vmatprep.subr.mxu0 %v872
      %1056 = vmatpush1.msra.mxu0 %v871
      %1057 = vmatprep.subr.mxu0 %v875
      %1058 = vmatpush1.msra.mxu0 %v874
      %1059 = vmatprep.subr.mxu0 %v878
      %1060 = vmatpush1.msra.mxu0 %v877
      %1061 = vmatprep.subr.mxu0 %v881
      %1062 = vmatpush1.msra.mxu0 %v880
      %1063 = vmatprep.subr.mxu0 %v884
      %1064 = vmatpush1.msra.mxu0 %v883
      %1065 = vmatprep.subr.mxu0 %v887
      %1066 = vmatpush1.msra.mxu0 %v886
      %1067 = vmatprep.subr.mxu0 %v890
      %1068 = vmatpush1.msra.mxu0 %v889
      %1069 = vmatprep.subr.mxu0 %v893
      %1070 = vmatpush1.msra.mxu0 %v892
      %1071 = vmatprep.subr.mxu0 %v896
      %1072 = vmatpush1.msra.mxu0 %v895
      %1073 = vmatprep.subr.mxu0 %v899
      %1074 = vmatpush1.msra.mxu0 %v898
      %1075 = vmatprep.subr.mxu0 %v902
      %1076 = vmatpush1.msra.mxu0 %v901
      %1077 = vmatprep.subr.mxu0 %v905
      %1078 = vmatpush1.msra.mxu0 %v904
      %1079 = vmatprep.subr.mxu0 %v908
      %1080 = vmatpush1.msra.mxu0 %v907
      %1081 = vmatprep.subr.mxu0 %v911
      %1082 = vmatpush1.msra.mxu0 %v910
      %1083 = vmatprep.subr.mxu0 %v914
      %1084 = vmatpush1.msra.mxu0 %v913
      %1085 = vmatprep.subr.mxu0 %v917
      %1086 = vmatpush1.msra.mxu0 %v916
      %1087 = vmatprep.subr.mxu0 %v920
      %1088 = vmatpush1.msra.mxu0 %v919
      %1089 = vmatprep.subr.mxu0 %v923
      %1090 = vmatpush1.msra.mxu0 %v922
      %1091 = vmatprep.subr.mxu0 %v926
      %1092 = vmatpush1.msra.mxu0 %v925
      %1093 = vmatprep.subr.mxu0 %v929
      %1094 = vmatpush1.msra.mxu0 %v928
      %1095 = vmatprep.subr.mxu0 %v932
      %1096 = vmatpush1.msra.mxu0 %v931
      %1097 = vmatprep.subr.mxu0 %v935
      %1098 = vmatpush1.msra.mxu0 %v934
      %1099 = vmatprep.subr.mxu0 %v938
      %1100 = vmatpush1.msra.mxu0 %v937
      %1101 = vmatprep.subr.mxu0 %v941
      %1102 = vmatpush1.msra.mxu0 %v940
      %1103 = vmatprep.subr.mxu0 %v944
      %1104 = vmatpush1.msra.mxu0 %v943
      %1105 = vmatprep.subr.mxu0 %v947
      %1106 = vmatpush1.msra.mxu0 %v946
      %1107 = vmatprep.subr.mxu0 %v950
      %1108 = vmatpush1.msra.mxu0 %v949
      %1109 = vmatprep.subr.mxu0 %v953
      %1110 = vmatpush1.msra.mxu0 %v952
      %1111 = vmatprep.subr.mxu0 %v956
      %1112 = vmatpush1.msra.mxu0 %v955
      %1113 = vmatprep.subr.mxu0 %v959
      %1114 = vmatpush1.msra.mxu0 %v958
      %1115 = vmatprep.subr.mxu0 %v962
      %1116 = vmatpush1.msra.mxu0 %v961
      %1117 = vmatprep.subr.mxu0 %v965
      %1118 = vmatpush1.msra.mxu0 %v964
      %1119 = vmatprep.mubr.f32.mxu0 %v774
      %1120 = vmatmul.mubr.f32.gmra.mrb[0].mxu0 %v773
      %v1121 = vpop.f32.mrb[0].mxu0
      %v1122 = vadd.f32 %v1051, %v1121
      %v1123 = vpop.f32.mrb[0].mxu0
      %v1124 = vadd.f32 %v1053, %v1123
      %1125 = vdwg.mxu0
      %1126 = vmatprep.subr.mxu0 0.0
      %1127 = vmatpush1.msra.mxu0 %v777
      %1128 = vmatprep.subr.mxu0 0.0
      %1129 = vmatpush1.msra.mxu0 %v780
      %1130 = vmatprep.subr.mxu0 0.0
      %1131 = vmatpush1.msra.mxu0 %v783
      %1132 = vmatprep.subr.mxu0 0.0
      %1133 = vmatpush1.msra.mxu0 %v786
      %1134 = vmatprep.subr.mxu0 0.0
      %1135 = vmatpush1.msra.mxu0 %v789
      %1136 = vmatprep.subr.mxu0 0.0
      %1137 = vmatpush1.msra.mxu0 %v792
      %1138 = vmatprep.subr.mxu0 0.0
      %1139 = vmatpush1.msra.mxu0 %v795
      %1140 = vmatprep.subr.mxu0 0.0
      %1141 = vmatpush1.msra.mxu0 %v798
      %1142 = vmatprep.subr.mxu0 0.0
      %1143 = vmatpush1.msra.mxu0 %v801
      %1144 = vmatprep.subr.mxu0 0.0
      %1145 = vmatpush1.msra.mxu0 %v804
      %1146 = vmatprep.subr.mxu0 0.0
      %1147 = vmatpush1.msra.mxu0 %v807
      %1148 = vmatprep.subr.mxu0 0.0
      %1149 = vmatpush1.msra.mxu0 %v810
      %1150 = vmatprep.subr.mxu0 0.0
      %1151 = vmatpush1.msra.mxu0 %v813
      %1152 = vmatprep.subr.mxu0 0.0
      %1153 = vmatpush1.msra.mxu0 %v816
      %1154 = vmatprep.subr.mxu0 0.0
      %1155 = vmatpush1.msra.mxu0 %v819
      %1156 = vmatprep.subr.mxu0 0.0
      %1157 = vmatpush1.msra.mxu0 %v822
      %1158 = vmatprep.subr.mxu0 0.0
      %1159 = vmatpush1.msra.mxu0 %v825
      %1160 = vmatprep.subr.mxu0 0.0
      %1161 = vmatpush1.msra.mxu0 %v828
      %1162 = vmatprep.subr.mxu0 0.0
      %1163 = vmatpush1.msra.mxu0 %v831
      %1164 = vmatprep.subr.mxu0 0.0
      %1165 = vmatpush1.msra.mxu0 %v834
      %1166 = vmatprep.subr.mxu0 0.0
      %1167 = vmatpush1.msra.mxu0 %v837
      %1168 = vmatprep.subr.mxu0 0.0
      %1169 = vmatpush1.msra.mxu0 %v840
      %1170 = vmatprep.subr.mxu0 0.0
      %1171 = vmatpush1.msra.mxu0 %v843
      %1172 = vmatprep.subr.mxu0 0.0
      %1173 = vmatpush1.msra.mxu0 %v846
      %1174 = vmatprep.subr.mxu0 0.0
      %1175 = vmatpush1.msra.mxu0 %v849
      %1176 = vmatprep.subr.mxu0 0.0
      %1177 = vmatpush1.msra.mxu0 %v852
      %1178 = vmatprep.subr.mxu0 0.0
      %1179 = vmatpush1.msra.mxu0 %v855
      %1180 = vmatprep.subr.mxu0 0.0
      %1181 = vmatpush1.msra.mxu0 %v858
      %1182 = vmatprep.subr.mxu0 0.0
      %1183 = vmatpush1.msra.mxu0 %v861
      %1184 = vmatprep.subr.mxu0 0.0
      %1185 = vmatpush1.msra.mxu0 %v864
      %1186 = vmatprep.subr.mxu0 0.0
      %1187 = vmatpush1.msra.mxu0 %v867
      %1188 = vmatprep.subr.mxu0 0.0
      %1189 = vmatpush1.msra.mxu0 %v870
      %1190 = vmatprep.mubr.f32.mxu0 %v772
      %1191 = vmatmul.mubr.f32.gmra.mrb[0].mxu0 %v771
      %v1192 = vpop.f32.mrb[0].mxu0
      %v1193 = vadd.f32 %v980, %v1192
      %v1194 = vpop.f32.mrb[0].mxu0
      %1195 = vdwg.mxu0
      %1196 = vmatprep.subr.mxu0 0.0
      %1197 = vmatpush1.msra.mxu0 %v873
      %1198 = vmatprep.subr.mxu0 0.0
      %1199 = vmatpush1.msra.mxu0 %v876
      %1200 = vmatprep.subr.mxu0 0.0
      %1201 = vmatpush1.msra.mxu0 %v879
      %1202 = vmatprep.subr.mxu0 0.0
      %1203 = vmatpush1.msra.mxu0 %v882
      %1204 = vmatprep.subr.mxu0 0.0
      %1205 = vmatpush1.msra.mxu0 %v885
      %1206 = vmatprep.subr.mxu0 0.0
      %1207 = vmatpush1.msra.mxu0 %v888
      %1208 = vmatprep.subr.mxu0 0.0
      %1209 = vmatpush1.msra.mxu0 %v891
      %1210 = vmatprep.subr.mxu0 0.0
      %1211 = vmatpush1.msra.mxu0 %v894
      %1212 = vmatprep.subr.mxu0 0.0
      %1213 = vmatpush1.msra.mxu0 %v897
      %1214 = vmatprep.subr.mxu0 0.0
      %1215 = vmatpush1.msra.mxu0 %v900
      %1216 = vmatprep.subr.mxu0 0.0
      %1217 = vmatpush1.msra.mxu0 %v903
      %1218 = vmatprep.subr.mxu0 0.0
      %1219 = vmatpush1.msra.mxu0 %v906
      %1220 = vmatprep.subr.mxu0 0.0
      %1221 = vmatpush1.msra.mxu0 %v909
      %1222 = vmatprep.subr.mxu0 0.0
      %1223 = vmatpush1.msra.mxu0 %v912
      %1224 = vmatprep.subr.mxu0 0.0
      %1225 = vmatpush1.msra.mxu0 %v915
      %1226 = vmatprep.subr.mxu0 0.0
      %1227 = vmatpush1.msra.mxu0 %v918
      %1228 = vmatprep.subr.mxu0 0.0
      %1229 = vmatpush1.msra.mxu0 %v921
      %1230 = vmatprep.subr.mxu0 0.0
      %1231 = vmatpush1.msra.mxu0 %v924
      %1232 = vmatprep.subr.mxu0 0.0
      %1233 = vmatpush1.msra.mxu0 %v927
      %1234 = vmatprep.subr.mxu0 0.0
      %1235 = vmatpush1.msra.mxu0 %v930
      %1236 = vmatprep.subr.mxu0 0.0
      %1237 = vmatpush1.msra.mxu0 %v933
      %1238 = vmatprep.subr.mxu0 0.0
      %1239 = vmatpush1.msra.mxu0 %v936
      %1240 = vmatprep.subr.mxu0 0.0
      %1241 = vmatpush1.msra.mxu0 %v939
      %1242 = vmatprep.subr.mxu0 0.0
      %1243 = vmatpush1.msra.mxu0 %v942
      %1244 = vmatprep.subr.mxu0 0.0
      %1245 = vmatpush1.msra.mxu0 %v945
      %1246 = vmatprep.subr.mxu0 0.0
      %1247 = vmatpush1.msra.mxu0 %v948
      %1248 = vmatprep.subr.mxu0 0.0
      %1249 = vmatpush1.msra.mxu0 %v951
      %1250 = vmatprep.subr.mxu0 0.0
      %1251 = vmatpush1.msra.mxu0 %v954
      %1252 = vmatprep.subr.mxu0 0.0
      %1253 = vmatpush1.msra.mxu0 %v957
      %1254 = vmatprep.subr.mxu0 0.0
      %1255 = vmatpush1.msra.mxu0 %v960
      %1256 = vmatprep.subr.mxu0 0.0
      %1257 = vmatpush1.msra.mxu0 %v963
      %1258 = vmatprep.subr.mxu0 0.0
      %1259 = vmatpush1.msra.mxu0 %v966
      %1260 = vmatprep.mubr.f32.mxu0 %v774
      %1261 = vmatmul.mubr.f32.gmra.mrb[0].mxu0 %v773
      %v1262 = vpop.f32.mrb[0].mxu0
      %v1263 = vadd.f32 %v1193, %v1262
      %v1264 = vpop.f32.mrb[0].mxu0
      %1265 = vdwg.mxu0
      %v1269 = vcombine.low %v1122, %v1124
      %v1271 = vunpack.c.l.s4 1983009808
      %v1272 = vunpack.c.0.s8 %v1271
      %v1273 = vlaneseq
      %v1274 = vshrl.u32 %v1273, 7
      %v1275 = vsub.s32 %v1272, %v1274
      %v1276 = vrot.slane %v1269, %v1275
      %v1278 = vunpack.c.l.s4 1983009808
      %v1279 = vunpack.c.0.s8 %v1278
      %v1280 = vlaneseq
      %v1281 = vshrl.u32 %v1280, 7
      %v1282 = vsub.s32 %v1279, %v1281
      %v1283 = vrot.slane %v1263, %v1282
      %v1284 = vcombine.low %v1276, %v1283
      %1286 = vst [vmem:[#allocation9] sm:$0x3f] %v1284
    $region41: #{tpu_custom_call.1} parent=1 // pred_fallthru
      _
    // Predicated region
    $region42: #{tpu_custom_call.1} parent=1 // pred_check
      _
    $region43: #{tpu_custom_call.1} parent=1 // pred_check_branch
      %1288 = sbr.rel (0) target = $region45
    $region44: #{tpu_custom_call.1} parent=1 // pred_region
      %s1290 = ssub.s32 96, 96
      %1291 = vsyncadd [#allocation5], %s1290
      %s1293 = sshll.u32 [#allocation9], 4
      %s1294 = int_to_ptr.vmem [resolvable:$true] %s1293
      %1296 = dma.vmem_to_hbm [thread:$0]  %s1294, 96, %s5, [#allocation5]
    $region45: #{tpu_custom_call.1} parent=1 // pred_fallthru
      _
    // Predicated region
    $region46: #{tpu_custom_call.1} parent=1 // pred_check
      _
    $region47: #{tpu_custom_call.1} parent=1 // pred_check_branch
      %1298 = sbr.rel (0) target = $region49
    $region48: #{tpu_custom_call.1} parent=1 // pred_region
      %1299 = dma.done [#allocation5], 96
    $region49: #{tpu_custom_call.1} parent=1 // pred_fallthru
      _
    %1300 = vsyncpa [#allocation4], 1
    %1301 = vsyncpa [#allocation7], 1
    %1302 = vsyncpa [#allocation5], 1

</llo_original>
